<compile_context>
chip_gen: v7x
topology: tpu7x:2x2x1
jax: 0.10.0
libtpu: 0.0.40
codegen_flags: <defaults>
</compile_context>

<pallas_src>
import math
import jax
import jax.numpy as jnp
from jax.experimental import pallas as pl
from jax.experimental.pallas import tpu as pltpu

# ----- small config consistent with the module's structure -----
N_VOCAB = 100
EMBED_DIM = 64            # embed_dim (E)
CONV_CHANNELS = 128       # conv stack channels (C)
KERNEL_SIZE = 5
N_GLU_LAYERS = 2
DILATION = 1
PAD = (KERNEL_SIZE - 1) // 2 * DILATION
PADDING_IDX = 0
BATCH = 2
SEQ = 16
BT = BATCH * SEQ          # batch folded into matmul M dimension
SQRT_HALF = math.sqrt(0.5)


def encoder_kernel(x_ref, wpre_ref, bpre_ref, wglu_ref, bglu_ref,
                   wpost_ref, bpost_ref, out_ref):
    # x_ref: (BT, E) f32 -- embedded text with batch folded into rows (== input_embedding)
    x = x_ref[...]

    # Conv1D(kernel_size=1) E->C followed by nn.ReLU (inserted because E != C); kept f32.
    h = jnp.dot(x, wpre_ref[...], preferred_element_type=jnp.float32) + bpre_ref[...]
    h = jnp.maximum(h, 0.0)                                       # (BT, C)

    # Per-tap validity masks (hoisted out of the layer loop): tap j at row r reads
    # h[r + j - PAD]; it is valid only if that source row is inside the same batch
    # element (zero halo padding otherwise).
    row = jax.lax.broadcasted_iota(jnp.int32, (BT, 1), 0)
    pos = row % SEQ
    masks = []
    for j in range(KERNEL_SIZE):
        d = (j - PAD) * DILATION
        masks.append((pos + d >= 0) & (pos + d < SEQ))            # (BT, 1) bool

    # Conv1DGLU blocks (non-causal, residual=True); dropout is eval-mode no-op.
    for l in range(N_GLU_LAYERS):
        residual = h
        taps = []
        for j in range(KERNEL_SIZE):
            d = (j - PAD) * DILATION
            if d == 0:
                taps.append(h)
            else:
                # sublane rotation (XLU) + edge mask keeps the shift in vregs
                shifted = pltpu.roll(h, shift=(-d) % BT, axis=0)  # row r -> h[r + d]
                taps.append(jnp.where(masks[j], shifted, 0.0))
        # Fused im2col: one (BT, K*C) @ (K*C, 2C) matmul per layer, bf16 operands,
        # f32 accumulation inside the MXU.
        im2col = jnp.concatenate(taps, axis=1).astype(jnp.bfloat16)   # (BT, K*C)
        acc = jnp.dot(im2col, wglu_ref[l],
                      preferred_element_type=jnp.float32) + bglu_ref[l]
        a = acc[:, :CONV_CHANNELS]
        b = acc[:, CONV_CHANNELS:]
        h = (a * jax.nn.sigmoid(b) + residual) * SQRT_HALF        # GLU + residual scale

    # final Conv1D(kernel_size=1) C -> E (f32)
    keys = jnp.dot(h, wpost_ref[...], preferred_element_type=jnp.float32) + bpost_ref[...]
    values = (keys + x) * SQRT_HALF

    # Lane-dense 128-wide output slab: keys in lanes [0, E), values in lanes [E, 2E).
    out_ref[...] = jnp.concatenate([keys, values], axis=1).astype(out_ref.dtype)


def encoder_forward(text_sequences, params):
    # embedding lookup (gather) stays in plain JAX glue; dropout is eval no-op
    emb = jnp.take(params["embedding"], text_sequences, axis=0)       # (B, T, E) f32
    x = emb.reshape(BT, EMBED_DIM)                                    # fold batch into M

    # stage conv weights im2col-style: (L, K, C, 2C) -> (L, K*C, 2C), bf16 MXU operands
    w_glu = params["w_glu"].reshape(
        N_GLU_LAYERS, KERNEL_SIZE * CONV_CHANNELS, 2 * CONV_CHANNELS).astype(jnp.bfloat16)

    grid_spec = pltpu.PrefetchScalarGridSpec(
        num_scalar_prefetch=0,
        grid=(1,),                                                    # single step
        in_specs=[
            pl.BlockSpec((BT, EMBED_DIM), lambda i: (0, 0)),
            pl.BlockSpec((EMBED_DIM, CONV_CHANNELS), lambda i: (0, 0)),
            pl.BlockSpec((1, CONV_CHANNELS), lambda i: (0, 0)),
            pl.BlockSpec((N_GLU_LAYERS, KERNEL_SIZE * CONV_CHANNELS, 2 * CONV_CHANNELS),
                         lambda i: (0, 0, 0)),
            pl.BlockSpec((N_GLU_LAYERS, 1, 2 * CONV_CHANNELS), lambda i: (0, 0, 0)),
            pl.BlockSpec((CONV_CHANNELS, EMBED_DIM), lambda i: (0, 0)),
            pl.BlockSpec((1, EMBED_DIM), lambda i: (0, 0)),
        ],
        out_specs=pl.BlockSpec((BT, 2 * EMBED_DIM), lambda i: (0, 0)),
    )

    packed = pl.pallas_call(
        encoder_kernel,
        out_shape=jax.ShapeDtypeStruct((BT, 2 * EMBED_DIM), jnp.float32),
        grid_spec=grid_spec,
        compiler_params=pltpu.CompilerParams(dimension_semantics=("arbitrary",)),
    )(x, params["w_pre"], params["b_pre"], w_glu, params["b_glu"],
      params["w_post"], params["b_post"])

    keys = packed[:, :EMBED_DIM].reshape(BATCH, SEQ, EMBED_DIM)
    values = packed[:, EMBED_DIM:].reshape(BATCH, SEQ, EMBED_DIM)
    return keys, values


def encoder_reference(text_sequences, params):
    """Pure-JAX f32 reference of the same forward (eval mode, n_speakers=1)."""
    emb = jnp.take(params["embedding"], text_sequences, axis=0)
    hi = jax.lax.Precision.HIGHEST
    h = jnp.einsum('bte,ec->btc', emb, params["w_pre"], precision=hi) + params["b_pre"][0]
    h = jnp.maximum(h, 0.0)
    for l in range(N_GLU_LAYERS):
        residual = h
        hp = jnp.pad(h, ((0, 0), (PAD, PAD), (0, 0)))
        acc = jnp.zeros((BATCH, SEQ, 2 * CONV_CHANNELS), jnp.float32)
        for j in range(KERNEL_SIZE):
            acc = acc + jnp.einsum('btc,cd->btd',
                                   hp[:, j * DILATION:j * DILATION + SEQ, :],
                                   params["w_glu"][l, j], precision=hi)
        acc = acc + params["b_glu"][l, 0]
        a, b = acc[..., :CONV_CHANNELS], acc[..., CONV_CHANNELS:]
        h = (a * jax.nn.sigmoid(b) + residual) * SQRT_HALF
    keys = jnp.einsum('btc,ce->bte', h, params["w_post"], precision=hi) + params["b_post"][0]
    values = (keys + emb) * SQRT_HALF
    return keys, values


def init_params(key):
    ks = jax.random.split(key, 5)
    embedding = 0.1 * jax.random.normal(ks[0], (N_VOCAB, EMBED_DIM), jnp.float32)
    embedding = embedding.at[PADDING_IDX].set(0.0)          # padding_idx row is zero
    # deterministic synthetic init, std roughly matching the Conv1D std_mul scheme
    w_pre = jax.random.normal(ks[1], (EMBED_DIM, CONV_CHANNELS), jnp.float32) \
        * math.sqrt(1.0 / EMBED_DIM)
    b_pre = jnp.zeros((1, CONV_CHANNELS), jnp.float32)
    w_glu = jax.random.normal(
        ks[2], (N_GLU_LAYERS, KERNEL_SIZE, CONV_CHANNELS, 2 * CONV_CHANNELS), jnp.float32) \
        * math.sqrt(4.0 * (1.0 - 0.1) / (KERNEL_SIZE * CONV_CHANNELS))
    b_glu = jnp.zeros((N_GLU_LAYERS, 1, 2 * CONV_CHANNELS), jnp.float32)
    w_post = jax.random.normal(ks[3], (CONV_CHANNELS, EMBED_DIM), jnp.float32) \
        * math.sqrt(4.0 * (1.0 - 0.1) / CONV_CHANNELS)
    b_post = jnp.zeros((1, EMBED_DIM), jnp.float32)
    return dict(embedding=embedding, w_pre=w_pre, b_pre=b_pre,
                w_glu=w_glu, b_glu=b_glu, w_post=w_post, b_post=b_post)


if __name__ == "__main__":
    key = jax.random.PRNGKey(0)
    pkey, tkey = jax.random.split(key)
    params = init_params(pkey)
    text = jax.random.randint(tkey, (BATCH, SEQ), 0, N_VOCAB, dtype=jnp.int32)
    text = text.at[:, -2:].set(PADDING_IDX)                 # some padding tokens

    keys, values = jax.jit(encoder_forward)(text, params)
    jax.block_until_ready((keys, values))

    ref_keys, ref_values = encoder_reference(text, params)
    assert keys.shape == (BATCH, SEQ, EMBED_DIM) and values.shape == (BATCH, SEQ, EMBED_DIM)
    # bf16 MXU operands in the GLU convs (f32 accumulation) -> slightly wider tolerance
    assert jnp.allclose(keys, ref_keys, rtol=1e-2, atol=1e-2)
    assert jnp.allclose(values, ref_values, rtol=1e-2, atol=1e-2)
    print("KERNEL_OK")
</pallas_src>

<mosaic_0001>
module attributes {stable_mosaic.version = 11 : i64} {
  func.func @encoder_kernel(%arg0: i32, %arg1: memref<32x64xf32, #tpu.memory_space<vmem>>, %arg2: memref<64x128xf32, #tpu.memory_space<vmem>>, %arg3: memref<1x128xf32, #tpu.memory_space<vmem>>, %arg4: memref<2x640x256xbf16, #tpu.memory_space<vmem>>, %arg5: memref<2x1x256xf32, #tpu.memory_space<vmem>>, %arg6: memref<128x64xf32, #tpu.memory_space<vmem>>, %arg7: memref<1x64xf32, #tpu.memory_space<vmem>>, %arg8: memref<32x128xf32, #tpu.memory_space<vmem>>) attributes {dimension_semantics = [#tpu.dimension_semantics<arbitrary>], iteration_bounds = array<i64: 1>, scalar_prefetch = 0 : i64, scratch_operands = 0 : i64, tpu.core_type = #tpu.core_type<tc>, window_params = [{pipeline_mode = #tpu.pipeline_mode<synchronous>, transform_indices = @transform_0, window_bounds = array<i64: 32, 64>}, {pipeline_mode = #tpu.pipeline_mode<synchronous>, transform_indices = @transform_1, window_bounds = array<i64: 64, 128>}, {pipeline_mode = #tpu.pipeline_mode<synchronous>, transform_indices = @transform_2, window_bounds = array<i64: 1, 128>}, {pipeline_mode = #tpu.pipeline_mode<synchronous>, transform_indices = @transform_3, window_bounds = array<i64: 2, 640, 256>}, {pipeline_mode = #tpu.pipeline_mode<synchronous>, transform_indices = @transform_4, window_bounds = array<i64: 2, 1, 256>}, {pipeline_mode = #tpu.pipeline_mode<synchronous>, transform_indices = @transform_5, window_bounds = array<i64: 128, 64>}, {pipeline_mode = #tpu.pipeline_mode<synchronous>, transform_indices = @transform_6, window_bounds = array<i64: 1, 64>}, {pipeline_mode = #tpu.pipeline_mode<synchronous>, transform_indices = @transform_7, window_bounds = array<i64: 32, 128>}]} {
    %c0 = arith.constant 0 : index
    %c0_0 = arith.constant 0 : index
    %0 = vector.load %arg1[%c0, %c0_0] : memref<32x64xf32, #tpu.memory_space<vmem>>, vector<32x64xf32>
    %c0_1 = arith.constant 0 : index
    %c0_2 = arith.constant 0 : index
    %1 = vector.load %arg2[%c0_1, %c0_2] : memref<64x128xf32, #tpu.memory_space<vmem>>, vector<64x128xf32>
    %cst = arith.constant dense<0.000000e+00> : vector<32x128xf32>
    %2 = tpu.matmul %0, %1, %cst {dimension_numbers = #tpu.dot_dimension_numbers<[1], [0], [0], [1], [0, 0, 1, 1], [], []>} : vector<32x64xf32>, vector<64x128xf32>, vector<32x128xf32> -> vector<32x128xf32>
    %c0_3 = arith.constant 0 : index
    %c0_4 = arith.constant 0 : index
    %3 = vector.load %arg3[%c0_3, %c0_4] : memref<1x128xf32, #tpu.memory_space<vmem>>, vector<1x128xf32>
    %4 = vector.broadcast %3 : vector<1x128xf32> to vector<32x128xf32>
    %5 = arith.addf %2, %4 : vector<32x128xf32>
    %cst_5 = arith.constant 0.000000e+00 : f32
    %6 = vector.broadcast %cst_5 : f32 to vector<32x128xf32>
    %7 = arith.maximumf %5, %6 : vector<32x128xf32>
    %8 = tpu.iota {dimensions = array<i32: 0>} : vector<32x1xi32>
    %c16_i32 = arith.constant 16 : i32
    %c0_i32 = arith.constant 0 : i32
    %9 = arith.cmpi eq, %c16_i32, %c0_i32 : i32
    %c1_i32 = arith.constant 1 : i32
    %10 = arith.select %9, %c1_i32, %c16_i32 : i32
    %11 = vector.broadcast %10 : i32 to vector<32x1xi32>
    %12 = arith.remsi %8, %11 : vector<32x1xi32>
    %c0_i32_6 = arith.constant 0 : i32
    %13 = vector.broadcast %c0_i32_6 : i32 to vector<32x1xi32>
    %14 = arith.cmpi ne, %12, %13 : vector<32x1xi32>
    %c0_i32_7 = arith.constant 0 : i32
    %15 = vector.broadcast %c0_i32_7 : i32 to vector<32x1xi32>
    %16 = arith.cmpi slt, %12, %15 : vector<32x1xi32>
    %c0_i32_8 = arith.constant 0 : i32
    %17 = arith.cmpi slt, %10, %c0_i32_8 : i32
    %18 = vector.broadcast %17 : i1 to vector<32x1xi1>
    %19 = vector.broadcast %18 : vector<32x1xi1> to vector<32x1xi1>
    %20 = arith.xori %16, %19 : vector<32x1xi1>
    %21 = arith.andi %20, %14 : vector<32x1xi1>
    %22 = vector.broadcast %10 : i32 to vector<32x1xi32>
    %23 = arith.addi %12, %22 : vector<32x1xi32>
    %24 = arith.select %21, %23, %12 : vector<32x1xi1>, vector<32x1xi32>
    %c-2_i32 = arith.constant -2 : i32
    %25 = vector.broadcast %c-2_i32 : i32 to vector<32x1xi32>
    %26 = arith.addi %24, %25 : vector<32x1xi32>
    %c0_i32_9 = arith.constant 0 : i32
    %27 = vector.broadcast %c0_i32_9 : i32 to vector<32x1xi32>
    %28 = arith.cmpi sge, %26, %27 : vector<32x1xi32>
    %c-2_i32_10 = arith.constant -2 : i32
    %29 = vector.broadcast %c-2_i32_10 : i32 to vector<32x1xi32>
    %30 = arith.addi %24, %29 : vector<32x1xi32>
    %c16_i32_11 = arith.constant 16 : i32
    %31 = vector.broadcast %c16_i32_11 : i32 to vector<32x1xi32>
    %32 = arith.cmpi slt, %30, %31 : vector<32x1xi32>
    %33 = arith.andi %28, %32 : vector<32x1xi1>
    %c-1_i32 = arith.constant -1 : i32
    %34 = vector.broadcast %c-1_i32 : i32 to vector<32x1xi32>
    %35 = arith.addi %24, %34 : vector<32x1xi32>
    %c0_i32_12 = arith.constant 0 : i32
    %36 = vector.broadcast %c0_i32_12 : i32 to vector<32x1xi32>
    %37 = arith.cmpi sge, %35, %36 : vector<32x1xi32>
    %c-1_i32_13 = arith.constant -1 : i32
    %38 = vector.broadcast %c-1_i32_13 : i32 to vector<32x1xi32>
    %39 = arith.addi %24, %38 : vector<32x1xi32>
    %c16_i32_14 = arith.constant 16 : i32
    %40 = vector.broadcast %c16_i32_14 : i32 to vector<32x1xi32>
    %41 = arith.cmpi slt, %39, %40 : vector<32x1xi32>
    %42 = arith.andi %37, %41 : vector<32x1xi1>
    %c1_i32_15 = arith.constant 1 : i32
    %43 = vector.broadcast %c1_i32_15 : i32 to vector<32x1xi32>
    %44 = arith.addi %24, %43 : vector<32x1xi32>
    %c0_i32_16 = arith.constant 0 : i32
    %45 = vector.broadcast %c0_i32_16 : i32 to vector<32x1xi32>
    %46 = arith.cmpi sge, %44, %45 : vector<32x1xi32>
    %c1_i32_17 = arith.constant 1 : i32
    %47 = vector.broadcast %c1_i32_17 : i32 to vector<32x1xi32>
    %48 = arith.addi %24, %47 : vector<32x1xi32>
    %c16_i32_18 = arith.constant 16 : i32
    %49 = vector.broadcast %c16_i32_18 : i32 to vector<32x1xi32>
    %50 = arith.cmpi slt, %48, %49 : vector<32x1xi32>
    %51 = arith.andi %46, %50 : vector<32x1xi1>
    %c2_i32 = arith.constant 2 : i32
    %52 = vector.broadcast %c2_i32 : i32 to vector<32x1xi32>
    %53 = arith.addi %24, %52 : vector<32x1xi32>
    %c0_i32_19 = arith.constant 0 : i32
    %54 = vector.broadcast %c0_i32_19 : i32 to vector<32x1xi32>
    %55 = arith.cmpi sge, %53, %54 : vector<32x1xi32>
    %c2_i32_20 = arith.constant 2 : i32
    %56 = vector.broadcast %c2_i32_20 : i32 to vector<32x1xi32>
    %57 = arith.addi %24, %56 : vector<32x1xi32>
    %c16_i32_21 = arith.constant 16 : i32
    %58 = vector.broadcast %c16_i32_21 : i32 to vector<32x1xi32>
    %59 = arith.cmpi slt, %57, %58 : vector<32x1xi32>
    %60 = arith.andi %55, %59 : vector<32x1xi1>
    %c2_i32_22 = arith.constant 2 : i32
    %61 = tpu.dynamic_rotate %7 by %c2_i32_22 dim 0 : vector<32x128xf32>, i32 -> vector<32x128xf32>
    %cst_23 = arith.constant 0.000000e+00 : f32
    %62 = vector.shape_cast %33 : vector<32x1xi1> to vector<32x1xi1>
    %63 = vector.broadcast %62 : vector<32x1xi1> to vector<32x128xi1>
    %64 = vector.broadcast %cst_23 : f32 to vector<32x128xf32>
    %65 = arith.select %63, %61, %64 : vector<32x128xi1>, vector<32x128xf32>
    %c1_i32_24 = arith.constant 1 : i32
    %66 = tpu.dynamic_rotate %7 by %c1_i32_24 dim 0 : vector<32x128xf32>, i32 -> vector<32x128xf32>
    %cst_25 = arith.constant 0.000000e+00 : f32
    %67 = vector.shape_cast %42 : vector<32x1xi1> to vector<32x1xi1>
    %68 = vector.broadcast %67 : vector<32x1xi1> to vector<32x128xi1>
    %69 = vector.broadcast %cst_25 : f32 to vector<32x128xf32>
    %70 = arith.select %68, %66, %69 : vector<32x128xi1>, vector<32x128xf32>
    %c31_i32 = arith.constant 31 : i32
    %71 = tpu.dynamic_rotate %7 by %c31_i32 dim 0 : vector<32x128xf32>, i32 -> vector<32x128xf32>
    %cst_26 = arith.constant 0.000000e+00 : f32
    %72 = vector.shape_cast %51 : vector<32x1xi1> to vector<32x1xi1>
    %73 = vector.broadcast %72 : vector<32x1xi1> to vector<32x128xi1>
    %74 = vector.broadcast %cst_26 : f32 to vector<32x128xf32>
    %75 = arith.select %73, %71, %74 : vector<32x128xi1>, vector<32x128xf32>
    %c30_i32 = arith.constant 30 : i32
    %76 = tpu.dynamic_rotate %7 by %c30_i32 dim 0 : vector<32x128xf32>, i32 -> vector<32x128xf32>
    %cst_27 = arith.constant 0.000000e+00 : f32
    %77 = vector.shape_cast %60 : vector<32x1xi1> to vector<32x1xi1>
    %78 = vector.broadcast %77 : vector<32x1xi1> to vector<32x128xi1>
    %79 = vector.broadcast %cst_27 : f32 to vector<32x128xf32>
    %80 = arith.select %78, %76, %79 : vector<32x128xi1>, vector<32x128xf32>
    %81 = tpu.concatenate %65, %70, %7, %75, %80 in 1 : vector<32x128xf32>, vector<32x128xf32>, vector<32x128xf32>, vector<32x128xf32>, vector<32x128xf32> -> vector<32x640xf32>
    %82 = arith.truncf %81 : vector<32x640xf32> to vector<32x640xbf16>
    %c0_28 = arith.constant 0 : index
    %c0_29 = arith.constant 0 : index
    %c0_30 = arith.constant 0 : index
    %83 = vector.load %arg4[%c0_28, %c0_29, %c0_30] : memref<2x640x256xbf16, #tpu.memory_space<vmem>>, vector<1x640x256xbf16>
    %84 = vector.shape_cast %83 : vector<1x640x256xbf16> to vector<640x256xbf16>
    %cst_31 = arith.constant dense<0.000000e+00> : vector<32x256xf32>
    %85 = tpu.matmul %82, %84, %cst_31 {dimension_numbers = #tpu.dot_dimension_numbers<[1], [0], [0], [1], [0, 0, 1, 1], [], []>} : vector<32x640xbf16>, vector<640x256xbf16>, vector<32x256xf32> -> vector<32x256xf32>
    %c0_32 = arith.constant 0 : index
    %c0_33 = arith.constant 0 : index
    %c0_34 = arith.constant 0 : index
    %86 = vector.load %arg5[%c0_32, %c0_33, %c0_34] : memref<2x1x256xf32, #tpu.memory_space<vmem>>, vector<1x1x256xf32>
    %87 = vector.shape_cast %86 : vector<1x1x256xf32> to vector<1x256xf32>
    %88 = vector.broadcast %87 : vector<1x256xf32> to vector<32x256xf32>
    %89 = arith.addf %85, %88 : vector<32x256xf32>
    %90 = vector.extract_strided_slice %89 {offsets = [0, 0], sizes = [32, 128], strides = [1, 1]} : vector<32x256xf32> to vector<32x128xf32>
    %91 = vector.extract_strided_slice %89 {offsets = [0, 128], sizes = [32, 128], strides = [1, 1]} : vector<32x256xf32> to vector<32x128xf32>
    %92 = arith.negf %91 : vector<32x128xf32>
    %93 = math.exp %92 : vector<32x128xf32>
    %cst_35 = arith.constant 1.000000e+00 : f32
    %94 = vector.broadcast %cst_35 : f32 to vector<32x128xf32>
    %95 = arith.addf %94, %93 : vector<32x128xf32>
    %96 = arith.divf %94, %95 : vector<32x128xf32>
    %97 = arith.mulf %90, %96 : vector<32x128xf32>
    %98 = arith.addf %97, %7 : vector<32x128xf32>
    %cst_36 = arith.constant 0.707106769 : f32
    %99 = vector.broadcast %cst_36 : f32 to vector<32x128xf32>
    %100 = arith.mulf %98, %99 : vector<32x128xf32>
    %c2_i32_37 = arith.constant 2 : i32
    %101 = tpu.dynamic_rotate %100 by %c2_i32_37 dim 0 : vector<32x128xf32>, i32 -> vector<32x128xf32>
    %cst_38 = arith.constant 0.000000e+00 : f32
    %102 = vector.shape_cast %33 : vector<32x1xi1> to vector<32x1xi1>
    %103 = vector.broadcast %102 : vector<32x1xi1> to vector<32x128xi1>
    %104 = vector.broadcast %cst_38 : f32 to vector<32x128xf32>
    %105 = arith.select %103, %101, %104 : vector<32x128xi1>, vector<32x128xf32>
    %c1_i32_39 = arith.constant 1 : i32
    %106 = tpu.dynamic_rotate %100 by %c1_i32_39 dim 0 : vector<32x128xf32>, i32 -> vector<32x128xf32>
    %cst_40 = arith.constant 0.000000e+00 : f32
    %107 = vector.shape_cast %42 : vector<32x1xi1> to vector<32x1xi1>
    %108 = vector.broadcast %107 : vector<32x1xi1> to vector<32x128xi1>
    %109 = vector.broadcast %cst_40 : f32 to vector<32x128xf32>
    %110 = arith.select %108, %106, %109 : vector<32x128xi1>, vector<32x128xf32>
    %c31_i32_41 = arith.constant 31 : i32
    %111 = tpu.dynamic_rotate %100 by %c31_i32_41 dim 0 : vector<32x128xf32>, i32 -> vector<32x128xf32>
    %cst_42 = arith.constant 0.000000e+00 : f32
    %112 = vector.shape_cast %51 : vector<32x1xi1> to vector<32x1xi1>
    %113 = vector.broadcast %112 : vector<32x1xi1> to vector<32x128xi1>
    %114 = vector.broadcast %cst_42 : f32 to vector<32x128xf32>
    %115 = arith.select %113, %111, %114 : vector<32x128xi1>, vector<32x128xf32>
    %c30_i32_43 = arith.constant 30 : i32
    %116 = tpu.dynamic_rotate %100 by %c30_i32_43 dim 0 : vector<32x128xf32>, i32 -> vector<32x128xf32>
    %cst_44 = arith.constant 0.000000e+00 : f32
    %117 = vector.shape_cast %60 : vector<32x1xi1> to vector<32x1xi1>
    %118 = vector.broadcast %117 : vector<32x1xi1> to vector<32x128xi1>
    %119 = vector.broadcast %cst_44 : f32 to vector<32x128xf32>
    %120 = arith.select %118, %116, %119 : vector<32x128xi1>, vector<32x128xf32>
    %121 = tpu.concatenate %105, %110, %100, %115, %120 in 1 : vector<32x128xf32>, vector<32x128xf32>, vector<32x128xf32>, vector<32x128xf32>, vector<32x128xf32> -> vector<32x640xf32>
    %122 = arith.truncf %121 : vector<32x640xf32> to vector<32x640xbf16>
    %c1 = arith.constant 1 : index
    %c0_45 = arith.constant 0 : index
    %c0_46 = arith.constant 0 : index
    %123 = vector.load %arg4[%c1, %c0_45, %c0_46] : memref<2x640x256xbf16, #tpu.memory_space<vmem>>, vector<1x640x256xbf16>
    %124 = vector.shape_cast %123 : vector<1x640x256xbf16> to vector<640x256xbf16>
    %cst_47 = arith.constant dense<0.000000e+00> : vector<32x256xf32>
    %125 = tpu.matmul %122, %124, %cst_47 {dimension_numbers = #tpu.dot_dimension_numbers<[1], [0], [0], [1], [0, 0, 1, 1], [], []>} : vector<32x640xbf16>, vector<640x256xbf16>, vector<32x256xf32> -> vector<32x256xf32>
    %c1_48 = arith.constant 1 : index
    %c0_49 = arith.constant 0 : index
    %c0_50 = arith.constant 0 : index
    %126 = vector.load %arg5[%c1_48, %c0_49, %c0_50] : memref<2x1x256xf32, #tpu.memory_space<vmem>>, vector<1x1x256xf32>
    %127 = vector.shape_cast %126 : vector<1x1x256xf32> to vector<1x256xf32>
    %128 = vector.broadcast %127 : vector<1x256xf32> to vector<32x256xf32>
    %129 = arith.addf %125, %128 : vector<32x256xf32>
    %130 = vector.extract_strided_slice %129 {offsets = [0, 0], sizes = [32, 128], strides = [1, 1]} : vector<32x256xf32> to vector<32x128xf32>
    %131 = vector.extract_strided_slice %129 {offsets = [0, 128], sizes = [32, 128], strides = [1, 1]} : vector<32x256xf32> to vector<32x128xf32>
    %132 = arith.negf %131 : vector<32x128xf32>
    %133 = math.exp %132 : vector<32x128xf32>
    %cst_51 = arith.constant 1.000000e+00 : f32
    %134 = vector.broadcast %cst_51 : f32 to vector<32x128xf32>
    %135 = arith.addf %134, %133 : vector<32x128xf32>
    %136 = arith.divf %134, %135 : vector<32x128xf32>
    %137 = arith.mulf %130, %136 : vector<32x128xf32>
    %138 = arith.addf %137, %100 : vector<32x128xf32>
    %cst_52 = arith.constant 0.707106769 : f32
    %139 = vector.broadcast %cst_52 : f32 to vector<32x128xf32>
    %140 = arith.mulf %138, %139 : vector<32x128xf32>
    %c0_53 = arith.constant 0 : index
    %c0_54 = arith.constant 0 : index
    %141 = vector.load %arg6[%c0_53, %c0_54] : memref<128x64xf32, #tpu.memory_space<vmem>>, vector<128x64xf32>
    %cst_55 = arith.constant dense<0.000000e+00> : vector<32x64xf32>
    %142 = tpu.matmul %140, %141, %cst_55 {dimension_numbers = #tpu.dot_dimension_numbers<[1], [0], [0], [1], [0, 0, 1, 1], [], []>} : vector<32x128xf32>, vector<128x64xf32>, vector<32x64xf32> -> vector<32x64xf32>
    %c0_56 = arith.constant 0 : index
    %c0_57 = arith.constant 0 : index
    %143 = vector.load %arg7[%c0_56, %c0_57] : memref<1x64xf32, #tpu.memory_space<vmem>>, vector<1x64xf32>
    %144 = vector.broadcast %143 : vector<1x64xf32> to vector<32x64xf32>
    %145 = arith.addf %142, %144 : vector<32x64xf32>
    %146 = arith.addf %145, %0 : vector<32x64xf32>
    %cst_58 = arith.constant 0.707106769 : f32
    %147 = vector.broadcast %cst_58 : f32 to vector<32x64xf32>
    %148 = arith.mulf %146, %147 : vector<32x64xf32>
    %149 = tpu.concatenate %145, %148 in 1 : vector<32x64xf32>, vector<32x64xf32> -> vector<32x128xf32>
    %c0_59 = arith.constant 0 : index
    %c0_60 = arith.constant 0 : index
    %150 = vector.load %arg8[%c0_59, %c0_60] : memref<32x128xf32, #tpu.memory_space<vmem>>, vector<32x128xf32>
    tpu.vector_store %arg8[%c0_59, %c0_60], %149 {strides = array<i32>} : memref<32x128xf32, #tpu.memory_space<vmem>>, vector<32x128xf32>,
    return
  }
  func.func @transform_0(%arg0: i32) -> (i32, i32) {
    %c0_i32 = arith.constant 0 : i32
    %c0_i32_0 = arith.constant 0 : i32
    %c0_i32_1 = arith.constant 0 : i32
    return %c0_i32, %c0_i32_0 : i32, i32
  }
  func.func @transform_1(%arg0: i32) -> (i32, i32) {
    %c0_i32 = arith.constant 0 : i32
    %c0_i32_0 = arith.constant 0 : i32
    %c0_i32_1 = arith.constant 0 : i32
    return %c0_i32, %c0_i32_0 : i32, i32
  }
  func.func @transform_2(%arg0: i32) -> (i32, i32) {
    %c0_i32 = arith.constant 0 : i32
    %c0_i32_0 = arith.constant 0 : i32
    %c0_i32_1 = arith.constant 0 : i32
    return %c0_i32, %c0_i32_0 : i32, i32
  }
  func.func @transform_3(%arg0: i32) -> (i32, i32, i32) {
    %c0_i32 = arith.constant 0 : i32
    %c0_i32_0 = arith.constant 0 : i32
    %c0_i32_1 = arith.constant 0 : i32
    %c0_i32_2 = arith.constant 0 : i32
    return %c0_i32, %c0_i32_0, %c0_i32_1 : i32, i32, i32
  }
  func.func @transform_4(%arg0: i32) -> (i32, i32, i32) {
    %c0_i32 = arith.constant 0 : i32
    %c0_i32_0 = arith.constant 0 : i32
    %c0_i32_1 = arith.constant 0 : i32
    %c0_i32_2 = arith.constant 0 : i32
    return %c0_i32, %c0_i32_0, %c0_i32_1 : i32, i32, i32
  }
  func.func @transform_5(%arg0: i32) -> (i32, i32) {
    %c0_i32 = arith.constant 0 : i32
    %c0_i32_0 = arith.constant 0 : i32
    %c0_i32_1 = arith.constant 0 : i32
    return %c0_i32, %c0_i32_0 : i32, i32
  }
  func.func @transform_6(%arg0: i32) -> (i32, i32) {
    %c0_i32 = arith.constant 0 : i32
    %c0_i32_0 = arith.constant 0 : i32
    %c0_i32_1 = arith.constant 0 : i32
    return %c0_i32, %c0_i32_0 : i32, i32
  }
  func.func @transform_7(%arg0: i32) -> (i32, i32) {
    %c0_i32 = arith.constant 0 : i32
    %c0_i32_0 = arith.constant 0 : i32
    %c0_i32_1 = arith.constant 0 : i32
    return %c0_i32, %c0_i32_0 : i32, i32
  }
}

</mosaic_0001>

<llo_original>
// kernel: encoder_forward.1
$region0: #{encoder_forward.1}
  #allocation0 [shape = 'u32[]', space=smem, size = 0x4, offset = 0x4, fixed_abs, tag = 'smem constant byte address 0x4 - core index']
  #allocation1 [shape = 'u32[144,128]{1,0:T(1,128)}', space=vmem, size = 0x12000, scoped, tag = 'internal scratch']
  %s0 = inlined_call_operand.vmem [shape: f32[32,64], index: 0, kind: input, shape index: {}]
  %s1 = inlined_call_operand.vmem [shape: f32[64,128], index: 1, kind: input, shape index: {}]
  %s2 = inlined_call_operand.vmem [shape: f32[1,128], index: 2, kind: input, shape index: {}]
  %s3 = inlined_call_operand.vmem [shape: bf16[2,640,256], index: 3, kind: input, shape index: {}]
  %s4 = inlined_call_operand.vmem [shape: f32[2,1,256], index: 4, kind: input, shape index: {}]
  %s5 = inlined_call_operand.vmem [shape: f32[128,64], index: 5, kind: input, shape index: {}]
  %s6 = inlined_call_operand.vmem [shape: f32[1,64], index: 6, kind: input, shape index: {}]
  %s7 = inlined_call_operand.vmem [shape: f32[32,128], index: 7, kind: output, shape index: {}]
  %s8 = sld [smem:[#allocation0]]
  $region38: #{encoder_forward.1} parent=0
    _
  %s10 = ssub.s32 1, %s8
  %s11 = scalar_select 0, %s10, %s8
  // Predicated region
  $region2: #{encoder_forward.1} parent=0 // pred_check
    _
  $region3: #{encoder_forward.1} parent=0 // pred_check_branch
    %13 = sbr.rel (0) target = $region5
  $region4: #{encoder_forward.1} parent=0 // pred_region
    _
  $region5: #{encoder_forward.1} parent=0 // pred_fallthru
    _
  // Predicated region
  $region6: #{encoder_forward.1} parent=0 // pred_check
    _
  $region7: #{encoder_forward.1} parent=0 // pred_check_branch
    %15 = sbr.rel (0) target = $region9
  $region8: #{encoder_forward.1} parent=0 // pred_region
    _
  $region9: #{encoder_forward.1} parent=0 // pred_fallthru
    _
  // Predicated region
  $region10: #{encoder_forward.1} parent=0 // pred_check
    _
  $region11: #{encoder_forward.1} parent=0 // pred_check_branch
    %17 = sbr.rel (0) target = $region13
  $region12: #{encoder_forward.1} parent=0 // pred_region
    _
  $region13: #{encoder_forward.1} parent=0 // pred_fallthru
    _
  // Predicated region
  $region14: #{encoder_forward.1} parent=0 // pred_check
    _
  $region15: #{encoder_forward.1} parent=0 // pred_check_branch
    %19 = sbr.rel (0) target = $region17
  $region16: #{encoder_forward.1} parent=0 // pred_region
    _
  $region17: #{encoder_forward.1} parent=0 // pred_fallthru
    _
  // Predicated region
  $region18: #{encoder_forward.1} parent=0 // pred_check
    _
  $region19: #{encoder_forward.1} parent=0 // pred_check_branch
    %21 = sbr.rel (0) target = $region21
  $region20: #{encoder_forward.1} parent=0 // pred_region
    _
  $region21: #{encoder_forward.1} parent=0 // pred_fallthru
    _
  // Predicated region
  $region22: #{encoder_forward.1} parent=0 // pred_check
    _
  $region23: #{encoder_forward.1} parent=0 // pred_check_branch
    %23 = sbr.rel (0) target = $region25
  $region24: #{encoder_forward.1} parent=0 // pred_region
    _
  $region25: #{encoder_forward.1} parent=0 // pred_fallthru
    _
  // Predicated region
  $region26: #{encoder_forward.1} parent=0 // pred_check
    _
  $region27: #{encoder_forward.1} parent=0 // pred_check_branch
    %25 = sbr.rel (0) target = $region29
  $region28: #{encoder_forward.1} parent=0 // pred_region
    _
  $region29: #{encoder_forward.1} parent=0 // pred_fallthru
    _
  %v27 = vld [vmem:[%s0] sm:$0xff]
  %v28 = vld [vmem:[%s0 + $0x8] sm:$0xff]
  %v29 = vld [vmem:[%s0 + $0x10] sm:$0xff]
  %v30 = vld [vmem:[%s0 + $0x18] sm:$0xff]
  %v31 = vld [vmem:[%s1] sm:$0xff]
  %v32 = vld [vmem:[%s1 + $0x8] sm:$0xff]
  %v33 = vld [vmem:[%s1 + $0x10] sm:$0xff]
  %v34 = vld [vmem:[%s1 + $0x18] sm:$0xff]
  %v35 = vld [vmem:[%s1 + $0x20] sm:$0xff]
  %v36 = vld [vmem:[%s1 + $0x28] sm:$0xff]
  %v37 = vld [vmem:[%s1 + $0x30] sm:$0xff]
  %v38 = vld [vmem:[%s1 + $0x38] sm:$0xff]
  %v39 = vld [vmem:[%s2] sm:$0x1]
  %v41 = vlaneseq
  %v42 = vshrl.u32 %v41, 7
  %v43 = vsub.s32 0, %v42
  %v44 = vrot.slane %v39, %v43
  %vm46 = vcmask 523264
  %v48 = vsel %vm46, %v27, 0
  %v51 = vsel %vm46, %v28, 0
  %v54 = vsel %vm46, %v29, 0
  %v57 = vsel %vm46, %v30, 0
  %59 = vmatprep.subr.mxu0 0.0
  %60 = vmatpush1.msra.mxu0 %v31
  %61 = vmatprep.subr.mxu0 0.0
  %62 = vmatpush1.msra.mxu0 %v32
  %63 = vmatprep.subr.mxu0 0.0
  %64 = vmatpush1.msra.mxu0 %v33
  %65 = vmatprep.subr.mxu0 0.0
  %66 = vmatpush1.msra.mxu0 %v34
  %67 = vmatprep.subr.mxu0 0.0
  %68 = vmatpush1.msra.mxu0 %v35
  %69 = vmatprep.subr.mxu0 0.0
  %70 = vmatpush1.msra.mxu0 %v36
  %71 = vmatprep.subr.mxu0 0.0
  %72 = vmatpush1.msra.mxu0 %v37
  %73 = vmatprep.subr.mxu0 0.0
  %74 = vmatpush1.msra.mxu0 %v38
  %75 = vmatprep.subr.mxu0 0.0
  %76 = vmatpush1.msra.mxu0 0.0
  %77 = vmatprep.subr.mxu0 0.0
  %78 = vmatpush1.msra.mxu0 0.0
  %79 = vmatprep.subr.mxu0 0.0
  %80 = vmatpush1.msra.mxu0 0.0
  %81 = vmatprep.subr.mxu0 0.0
  %82 = vmatpush1.msra.mxu0 0.0
  %83 = vmatprep.subr.mxu0 0.0
  %84 = vmatpush1.msra.mxu0 0.0
  %85 = vmatprep.subr.mxu0 0.0
  %86 = vmatpush1.msra.mxu0 0.0
  %87 = vmatprep.subr.mxu0 0.0
  %88 = vmatpush1.msra.mxu0 0.0
  %89 = vmatprep.subr.mxu0 0.0
  %90 = vmatpush1.msra.mxu0 0.0
  %91 = vmatprep.subr.mxu0 0.0
  %92 = vmatpush1.msra.mxu0 0.0
  %93 = vmatprep.subr.mxu0 0.0
  %94 = vmatpush1.msra.mxu0 0.0
  %95 = vmatprep.subr.mxu0 0.0
  %96 = vmatpush1.msra.mxu0 0.0
  %97 = vmatprep.subr.mxu0 0.0
  %98 = vmatpush1.msra.mxu0 0.0
  %99 = vmatprep.subr.mxu0 0.0
  %100 = vmatpush1.msra.mxu0 0.0
  %101 = vmatprep.subr.mxu0 0.0
  %102 = vmatpush1.msra.mxu0 0.0
  %103 = vmatprep.subr.mxu0 0.0
  %104 = vmatpush1.msra.mxu0 0.0
  %105 = vmatprep.subr.mxu0 0.0
  %106 = vmatpush1.msra.mxu0 0.0
  %107 = vmatprep.subr.mxu0 0.0
  %108 = vmatpush1.msra.mxu0 0.0
  %109 = vmatprep.subr.mxu0 0.0
  %110 = vmatpush1.msra.mxu0 0.0
  %111 = vmatprep.subr.mxu0 0.0
  %112 = vmatpush1.msra.mxu0 0.0
  %113 = vmatprep.subr.mxu0 0.0
  %114 = vmatpush1.msra.mxu0 0.0
  %115 = vmatprep.subr.mxu0 0.0
  %116 = vmatpush1.msra.mxu0 0.0
  %117 = vmatprep.subr.mxu0 0.0
  %118 = vmatpush1.msra.mxu0 0.0
  %119 = vmatprep.subr.mxu0 0.0
  %120 = vmatpush1.msra.mxu0 0.0
  %121 = vmatprep.subr.mxu0 0.0
  %122 = vmatpush1.msra.mxu0 0.0
  %123 = vmatprep.mubr.f32.mxu0 0.0
  %124 = vmatmul.mubr.f32.gmra.mrb[0].mxu0 %v48
  %v125 = vpop.f32.mrb[0].mxu0
  %v126 = vadd.f32 %v44, %v125
  %v127 = vpop.f32.mrb[0].mxu0
  %128 = vmatprep.mubr.f32.mxu0 0.0
  %129 = vmatmul.mubr.f32.gmra.mrb[0].mxu0 %v51
  %v130 = vpop.f32.mrb[0].mxu0
  %v131 = vadd.f32 %v44, %v130
  %v132 = vpop.f32.mrb[0].mxu0
  %133 = vmatprep.mubr.f32.mxu0 0.0
  %134 = vmatmul.mubr.f32.gmra.mrb[0].mxu0 %v54
  %v135 = vpop.f32.mrb[0].mxu0
  %v136 = vadd.f32 %v44, %v135
  %v137 = vpop.f32.mrb[0].mxu0
  %138 = vmatprep.mubr.f32.mxu0 0.0
  %139 = vmatmul.mubr.f32.gmra.mrb[0].mxu0 %v57
  %v140 = vpop.f32.mrb[0].mxu0
  %v141 = vadd.f32 %v44, %v140
  %v142 = vpop.f32.mrb[0].mxu0
  %143 = vdwg.mxu0
  %v144 = vmax.f32 %v126, 0.0
  %v145 = vmax.f32 %v131, 0.0
  %v146 = vmax.f32 %v136, 0.0
  %v147 = vmax.f32 %v141, 0.0
  %v148 = vlaneseq
  %v149 = vshrl.u32 %v148, 7
  %v150 = vadd.s32 %v149, 8
  %v151 = vadd.s32 %v149, 16
  %v152 = vadd.s32 %v149, 24
  %vm153 = vcmp.lt.s32.totalorder %v149, 0
  %v154 = vsub.s32 0, %v149
  %v155 = vsel %vm153, %v154, %v149
  %v156 = vshrl.u32 %v155, 4
  %v157 = vand.u32 %v155, 15
  %v158 = vsub.s32 0, %v157
  %v159 = vsel %vm153, %v158, %v157
  %vm160 = vcmp.lt.s32.totalorder %v150, 0
  %v161 = vsub.s32 0, %v150
  %v162 = vsel %vm160, %v161, %v150
  %v163 = vshrl.u32 %v162, 4
  %v164 = vand.u32 %v162, 15
  %v165 = vsub.s32 0, %v164
  %v166 = vsel %vm160, %v165, %v164
  %vm167 = vcmp.lt.s32.totalorder %v151, 0
  %v168 = vsub.s32 0, %v151
  %v169 = vsel %vm167, %v168, %v151
  %v170 = vshrl.u32 %v169, 4
  %v171 = vand.u32 %v169, 15
  %v172 = vsub.s32 0, %v171
  %v173 = vsel %vm167, %v172, %v171
  %vm174 = vcmp.lt.s32.totalorder %v152, 0
  %v175 = vsub.s32 0, %v152
  %v176 = vsel %vm174, %v175, %v152
  %v177 = vshrl.u32 %v176, 4
  %v178 = vand.u32 %v176, 15
  %v179 = vsub.s32 0, %v178
  %v180 = vsel %vm174, %v179, %v178
  %vm181 = vcmp.ne.s32.totalorder %v159, 0
  %vm182 = vcmp.ne.s32.totalorder %v166, 0
  %vm183 = vcmp.ne.s32.totalorder %v173, 0
  %vm184 = vcmp.ne.s32.totalorder %v180, 0
  %vm185 = vcmp.lt.s32.totalorder %v159, 0
  %vm186 = vcmp.lt.s32.totalorder %v166, 0
  %vm187 = vcmp.lt.s32.totalorder %v173, 0
  %vm188 = vcmp.lt.s32.totalorder %v180, 0
  %vm189 = vmand %vm185, %vm181
  %vm190 = vmand %vm186, %vm182
  %vm191 = vmand %vm187, %vm183
  %vm192 = vmand %vm188, %vm184
  %v193 = vadd.s32 %v159, 16
  %v194 = vadd.s32 %v166, 16
  %v195 = vadd.s32 %v173, 16
  %v196 = vadd.s32 %v180, 16
  %v197 = vsel %vm189, %v193, %v159
  %v198 = vsel %vm190, %v194, %v166
  %v199 = vsel %vm191, %v195, %v173
  %v200 = vsel %vm192, %v196, %v180
  %v201 = vadd.s32 %v197, 4294967294
  %v202 = vadd.s32 %v198, 4294967294
  %v203 = vadd.s32 %v199, 4294967294
  %v204 = vadd.s32 %v200, 4294967294
  %vm205 = vcmp.ge.s32.totalorder %v201, 0
  %vm206 = vcmp.ge.s32.totalorder %v202, 0
  %vm207 = vcmp.ge.s32.totalorder %v203, 0
  %vm208 = vcmp.ge.s32.totalorder %v204, 0
  %vm209 = vcmp.lt.s32.totalorder %v201, 16
  %vm210 = vcmp.lt.s32.totalorder %v202, 16
  %vm211 = vcmp.lt.s32.totalorder %v203, 16
  %vm212 = vcmp.lt.s32.totalorder %v204, 16
  %vm213 = vmand %vm205, %vm209
  %vm214 = vmand %vm206, %vm210
  %vm215 = vmand %vm207, %vm211
  %vm216 = vmand %vm208, %vm212
  %v217 = vadd.s32 %v197, 4294967295
  %v218 = vadd.s32 %v198, 4294967295
  %v219 = vadd.s32 %v199, 4294967295
  %v220 = vadd.s32 %v200, 4294967295
  %vm221 = vcmp.ge.s32.totalorder %v217, 0
  %vm222 = vcmp.ge.s32.totalorder %v218, 0
  %vm223 = vcmp.ge.s32.totalorder %v219, 0
  %vm224 = vcmp.ge.s32.totalorder %v220, 0
  %vm225 = vcmp.lt.s32.totalorder %v217, 16
  %vm226 = vcmp.lt.s32.totalorder %v218, 16
  %vm227 = vcmp.lt.s32.totalorder %v219, 16
  %vm228 = vcmp.lt.s32.totalorder %v220, 16
  %vm229 = vmand %vm221, %vm225
  %vm230 = vmand %vm222, %vm226
  %vm231 = vmand %vm223, %vm227
  %vm232 = vmand %vm224, %vm228
  %v233 = vadd.s32 %v197, 1
  %v234 = vadd.s32 %v198, 1
  %v235 = vadd.s32 %v199, 1
  %v236 = vadd.s32 %v200, 1
  %vm237 = vcmp.ge.s32.totalorder %v233, 0
  %vm238 = vcmp.ge.s32.totalorder %v234, 0
  %vm239 = vcmp.ge.s32.totalorder %v235, 0
  %vm240 = vcmp.ge.s32.totalorder %v236, 0
  %vm241 = vcmp.lt.s32.totalorder %v233, 16
  %vm242 = vcmp.lt.s32.totalorder %v234, 16
  %vm243 = vcmp.lt.s32.totalorder %v235, 16
  %vm244 = vcmp.lt.s32.totalorder %v236, 16
  %vm245 = vmand %vm237, %vm241
  %vm246 = vmand %vm238, %vm242
  %vm247 = vmand %vm239, %vm243
  %vm248 = vmand %vm240, %vm244
  %v249 = vadd.s32 %v197, 2
  %v250 = vadd.s32 %v198, 2
  %v251 = vadd.s32 %v199, 2
  %v252 = vadd.s32 %v200, 2
  %vm253 = vcmp.ge.s32.totalorder %v249, 0
  %vm254 = vcmp.ge.s32.totalorder %v250, 0
  %vm255 = vcmp.ge.s32.totalorder %v251, 0
  %vm256 = vcmp.ge.s32.totalorder %v252, 0
  %vm257 = vcmp.lt.s32.totalorder %v249, 16
  %vm258 = vcmp.lt.s32.totalorder %v250, 16
  %vm259 = vcmp.lt.s32.totalorder %v251, 16
  %vm260 = vcmp.lt.s32.totalorder %v252, 16
  %vm261 = vmand %vm253, %vm257
  %vm262 = vmand %vm254, %vm258
  %vm263 = vmand %vm255, %vm259
  %vm264 = vmand %vm256, %vm260
  %v265 = vrot.slane %v144, 6
  %v266 = vrot.slane %v145, 6
  %v267 = vrot.slane %v146, 6
  %v268 = vrot.slane %v147, 6
  %vm269 = vcmp.lt.s32.totalorder %v149, 2
  %v270 = vsel %vm269, %v267, %v268
  %v271 = vsel %vm269, %v266, %v267
  %v272 = vsel %vm269, %v265, %v266
  %v273 = vsel %vm269, %v268, %v265
  %v274 = vsel %vm213, 1, 0
  %v275 = vsel %vm214, 1, 0
  %v276 = vsel %vm215, 1, 0
  %v277 = vsel %vm216, 1, 0
  %vm278 = vcmp.eq.s32.totalorder %v274, 1
  %vm279 = vcmp.eq.s32.totalorder %v275, 1
  %vm280 = vcmp.eq.s32.totalorder %v276, 1
  %vm281 = vcmp.eq.s32.totalorder %v277, 1
  %v282 = vsel %vm278, %v273, 0.0
  %v283 = vsel %vm279, %v272, 0.0
  %v284 = vsel %vm280, %v271, 0.0
  %v285 = vsel %vm281, %v270, 0.0
  %v286 = vrot.slane %v144, 7
  %v287 = vrot.slane %v145, 7
  %v288 = vrot.slane %v146, 7
  %v289 = vrot.slane %v147, 7
  %vm290 = vcmp.lt.s32.totalorder %v149, 1
  %v291 = vsel %vm290, %v288, %v289
  %v292 = vsel %vm290, %v287, %v288
  %v293 = vsel %vm290, %v286, %v287
  %v294 = vsel %vm290, %v289, %v286
  %v295 = vsel %vm229, 1, 0
  %v296 = vsel %vm230, 1, 0
  %v297 = vsel %vm231, 1, 0
  %v298 = vsel %vm232, 1, 0
  %vm299 = vcmp.eq.s32.totalorder %v295, 1
  %vm300 = vcmp.eq.s32.totalorder %v296, 1
  %vm301 = vcmp.eq.s32.totalorder %v297, 1
  %vm302 = vcmp.eq.s32.totalorder %v298, 1
  %v303 = vsel %vm299, %v294, 0.0
  %v304 = vsel %vm300, %v293, 0.0
  %v305 = vsel %vm301, %v292, 0.0
  %v306 = vsel %vm302, %v291, 0.0
  %v307 = vrot.slane %v144, 1
  %v308 = vrot.slane %v145, 1
  %v309 = vrot.slane %v146, 1
  %v310 = vrot.slane %v147, 1
  %vm311 = vcmp.lt.s32.totalorder %v149, 7
  %v312 = vsel %vm311, %v309, %v310
  %v313 = vsel %vm311, %v308, %v309
  %v314 = vsel %vm311, %v307, %v308
  %v315 = vsel %vm311, %v310, %v307
  %v316 = vsel %vm245, 1, 0
  %v317 = vsel %vm246, 1, 0
  %v318 = vsel %vm247, 1, 0
  %v319 = vsel %vm248, 1, 0
  %vm320 = vcmp.eq.s32.totalorder %v316, 1
  %vm321 = vcmp.eq.s32.totalorder %v317, 1
  %vm322 = vcmp.eq.s32.totalorder %v318, 1
  %vm323 = vcmp.eq.s32.totalorder %v319, 1
  %v324 = vsel %vm320, %v314, 0.0
  %v325 = vsel %vm321, %v313, 0.0
  %v326 = vsel %vm322, %v312, 0.0
  %v327 = vsel %vm323, %v315, 0.0
  %v328 = vrot.slane %v144, 2
  %v329 = vrot.slane %v145, 2
  %v330 = vrot.slane %v146, 2
  %v331 = vrot.slane %v147, 2
  %vm332 = vcmp.lt.s32.totalorder %v149, 6
  %v333 = vsel %vm332, %v330, %v331
  %v334 = vsel %vm332, %v329, %v330
  %v335 = vsel %vm332, %v328, %v329
  %v336 = vsel %vm332, %v331, %v328
  %v337 = vsel %vm261, 1, 0
  %v338 = vsel %vm262, 1, 0
  %v339 = vsel %vm263, 1, 0
  %v340 = vsel %vm264, 1, 0
  %vm341 = vcmp.eq.s32.totalorder %v337, 1
  %vm342 = vcmp.eq.s32.totalorder %v338, 1
  %vm343 = vcmp.eq.s32.totalorder %v339, 1
  %vm344 = vcmp.eq.s32.totalorder %v340, 1
  %v345 = vsel %vm341, %v335, 0.0
  %v346 = vsel %vm342, %v334, 0.0
  %v347 = vsel %vm343, %v333, 0.0
  %v348 = vsel %vm344, %v336, 0.0
  %v349 = vpack.c.bf16 %v283, %v282
  %v350 = vpack.c.bf16 %v304, %v303
  %v351 = vpack.c.bf16 %v145, %v144
  %v352 = vpack.c.bf16 %v325, %v324
  %v353 = vpack.c.bf16 %v346, %v345
  %v354 = vpack.c.bf16 %v285, %v284
  %v355 = vpack.c.bf16 %v306, %v305
  %v356 = vpack.c.bf16 %v147, %v146
  %v357 = vpack.c.bf16 %v327, %v326
  %v358 = vpack.c.bf16 %v348, %v347
  %v359 = vld [vmem:[%s3] sm:$0xff]
  %v360 = vld [vmem:[%s3 + $0x8] sm:$0xff]
  %v361 = vld [vmem:[%s3 + $0x10] sm:$0xff]
  %v362 = vld [vmem:[%s3 + $0x18] sm:$0xff]
  %v363 = vld [vmem:[%s3 + $0x20] sm:$0xff]
  %v364 = vld [vmem:[%s3 + $0x28] sm:$0xff]
  %v365 = vld [vmem:[%s3 + $0x30] sm:$0xff]
  %v366 = vld [vmem:[%s3 + $0x38] sm:$0xff]
  %v367 = vld [vmem:[%s3 + $0x40] sm:$0xff]
  %v368 = vld [vmem:[%s3 + $0x48] sm:$0xff]
  %v369 = vld [vmem:[%s3 + $0x50] sm:$0xff]
  %v370 = vld [vmem:[%s3 + $0x58] sm:$0xff]
  %v371 = vld [vmem:[%s3 + $0x60] sm:$0xff]
  %v372 = vld [vmem:[%s3 + $0x68] sm:$0xff]
  %v373 = vld [vmem:[%s3 + $0x70] sm:$0xff]
  %v374 = vld [vmem:[%s3 + $0x78] sm:$0xff]
  %v375 = vld [vmem:[%s3 + $0x80] sm:$0xff]
  %v376 = vld [vmem:[%s3 + $0x88] sm:$0xff]
  %v377 = vld [vmem:[%s3 + $0x90] sm:$0xff]
  %v378 = vld [vmem:[%s3 + $0x98] sm:$0xff]
  %v379 = vld [vmem:[%s3 + $0xa0] sm:$0xff]
  %v380 = vld [vmem:[%s3 + $0xa8] sm:$0xff]
  %v381 = vld [vmem:[%s3 + $0xb0] sm:$0xff]
  %v382 = vld [vmem:[%s3 + $0xb8] sm:$0xff]
  %v383 = vld [vmem:[%s3 + $0xc0] sm:$0xff]
  %v384 = vld [vmem:[%s3 + $0xc8] sm:$0xff]
  %v385 = vld [vmem:[%s3 + $0xd0] sm:$0xff]
  %v386 = vld [vmem:[%s3 + $0xd8] sm:$0xff]
  %v387 = vld [vmem:[%s3 + $0xe0] sm:$0xff]
  %v388 = vld [vmem:[%s3 + $0xe8] sm:$0xff]
  %v389 = vld [vmem:[%s3 + $0xf0] sm:$0xff]
  %v390 = vld [vmem:[%s3 + $0xf8] sm:$0xff]
  %v391 = vld [vmem:[%s3 + $0x100] sm:$0xff]
  %v392 = vld [vmem:[%s3 + $0x108] sm:$0xff]
  %v393 = vld [vmem:[%s3 + $0x110] sm:$0xff]
  %v394 = vld [vmem:[%s3 + $0x118] sm:$0xff]
  %v395 = vld [vmem:[%s3 + $0x120] sm:$0xff]
  %v396 = vld [vmem:[%s3 + $0x128] sm:$0xff]
  %v397 = vld [vmem:[%s3 + $0x130] sm:$0xff]
  %v398 = vld [vmem:[%s3 + $0x138] sm:$0xff]
  %v399 = vld [vmem:[%s3 + $0x140] sm:$0xff]
  %v400 = vld [vmem:[%s3 + $0x148] sm:$0xff]
  %v401 = vld [vmem:[%s3 + $0x150] sm:$0xff]
  %v402 = vld [vmem:[%s3 + $0x158] sm:$0xff]
  %v403 = vld [vmem:[%s3 + $0x160] sm:$0xff]
  %v404 = vld [vmem:[%s3 + $0x168] sm:$0xff]
  %v405 = vld [vmem:[%s3 + $0x170] sm:$0xff]
  %v406 = vld [vmem:[%s3 + $0x178] sm:$0xff]
  %v407 = vld [vmem:[%s3 + $0x180] sm:$0xff]
  %v408 = vld [vmem:[%s3 + $0x188] sm:$0xff]
  %v409 = vld [vmem:[%s3 + $0x190] sm:$0xff]
  %v410 = vld [vmem:[%s3 + $0x198] sm:$0xff]
  %v411 = vld [vmem:[%s3 + $0x1a0] sm:$0xff]
  %v412 = vld [vmem:[%s3 + $0x1a8] sm:$0xff]
  %v413 = vld [vmem:[%s3 + $0x1b0] sm:$0xff]
  %v414 = vld [vmem:[%s3 + $0x1b8] sm:$0xff]
  %v415 = vld [vmem:[%s3 + $0x1c0] sm:$0xff]
  %v416 = vld [vmem:[%s3 + $0x1c8] sm:$0xff]
  %v417 = vld [vmem:[%s3 + $0x1d0] sm:$0xff]
  %v418 = vld [vmem:[%s3 + $0x1d8] sm:$0xff]
  %v419 = vld [vmem:[%s3 + $0x1e0] sm:$0xff]
  %v420 = vld [vmem:[%s3 + $0x1e8] sm:$0xff]
  %v421 = vld [vmem:[%s3 + $0x1f0] sm:$0xff]
  %v422 = vld [vmem:[%s3 + $0x1f8] sm:$0xff]
  %v423 = vld [vmem:[%s3 + $0x200] sm:$0xff]
  %v424 = vld [vmem:[%s3 + $0x208] sm:$0xff]
  %v425 = vld [vmem:[%s3 + $0x210] sm:$0xff]
  %v426 = vld [vmem:[%s3 + $0x218] sm:$0xff]
  %v427 = vld [vmem:[%s3 + $0x220] sm:$0xff]
  %v428 = vld [vmem:[%s3 + $0x228] sm:$0xff]
  %v429 = vld [vmem:[%s3 + $0x230] sm:$0xff]
  %v430 = vld [vmem:[%s3 + $0x238] sm:$0xff]
  %v431 = vld [vmem:[%s3 + $0x240] sm:$0xff]
  %v432 = vld [vmem:[%s3 + $0x248] sm:$0xff]
  %v433 = vld [vmem:[%s3 + $0x250] sm:$0xff]
  %v434 = vld [vmem:[%s3 + $0x258] sm:$0xff]
  %v435 = vld [vmem:[%s3 + $0x260] sm:$0xff]
  %v436 = vld [vmem:[%s3 + $0x268] sm:$0xff]
  %v437 = vld [vmem:[%s3 + $0x270] sm:$0xff]
  %v438 = vld [vmem:[%s3 + $0x278] sm:$0xff]
  %v439 = vld [vmem:[%s4] sm:$0x3]
  %v441 = vlaneseq
  %v442 = vshrl.u32 %v441, 7
  %v443 = vsub.s32 0, %v442
  %v444 = vrot.slane %v439, %v443
  %v445 = vlaneseq
  %v446 = vshrl.u32 %v445, 7
  %v447 = vsub.s32 1, %v446
  %v448 = vrot.slane %v439, %v447
  %v531 = vunpack.c.l.b16 %v359
  %v532 = vunpack.c.h.b16 %v359
  %v533 = vunpack.c.l.b16 %v360
  %v534 = vunpack.c.h.b16 %v360
  %v535 = vunpack.c.l.b16 %v361
  %v536 = vunpack.c.h.b16 %v361
  %v537 = vunpack.c.l.b16 %v362
  %v538 = vunpack.c.h.b16 %v362
  %v539 = vunpack.c.l.b16 %v363
  %v540 = vunpack.c.h.b16 %v363
  %v541 = vunpack.c.l.b16 %v364
  %v542 = vunpack.c.h.b16 %v364
  %v543 = vunpack.c.l.b16 %v365
  %v544 = vunpack.c.h.b16 %v365
  %v545 = vunpack.c.l.b16 %v366
  %v546 = vunpack.c.h.b16 %v366
  %v547 = vunpack.c.l.b16 %v367
  %v548 = vunpack.c.h.b16 %v367
  %v549 = vunpack.c.l.b16 %v368
  %v550 = vunpack.c.h.b16 %v368
  %v551 = vunpack.c.l.b16 %v369
  %v552 = vunpack.c.h.b16 %v369
  %v553 = vunpack.c.l.b16 %v370
  %v554 = vunpack.c.h.b16 %v370
  %v555 = vunpack.c.l.b16 %v371
  %v556 = vunpack.c.h.b16 %v371
  %v557 = vunpack.c.l.b16 %v372
  %v558 = vunpack.c.h.b16 %v372
  %v559 = vunpack.c.l.b16 %v373
  %v560 = vunpack.c.h.b16 %v373
  %v561 = vunpack.c.l.b16 %v374
  %v562 = vunpack.c.h.b16 %v374
  %v563 = vunpack.c.l.b16 %v375
  %v564 = vunpack.c.h.b16 %v375
  %v565 = vunpack.c.l.b16 %v376
  %v566 = vunpack.c.h.b16 %v376
  %v567 = vunpack.c.l.b16 %v377
  %v568 = vunpack.c.h.b16 %v377
  %v569 = vunpack.c.l.b16 %v378
  %v570 = vunpack.c.h.b16 %v378
  %v571 = vunpack.c.l.b16 %v379
  %v572 = vunpack.c.h.b16 %v379
  %v573 = vunpack.c.l.b16 %v380
  %v574 = vunpack.c.h.b16 %v380
  %v575 = vunpack.c.l.b16 %v381
  %v576 = vunpack.c.h.b16 %v381
  %v577 = vunpack.c.l.b16 %v382
  %v578 = vunpack.c.h.b16 %v382
  %v579 = vunpack.c.l.b16 %v383
  %v580 = vunpack.c.h.b16 %v383
  %v581 = vunpack.c.l.b16 %v384
  %v582 = vunpack.c.h.b16 %v384
  %v583 = vunpack.c.l.b16 %v385
  %v584 = vunpack.c.h.b16 %v385
  %v585 = vunpack.c.l.b16 %v386
  %v586 = vunpack.c.h.b16 %v386
  %v587 = vunpack.c.l.b16 %v387
  %v588 = vunpack.c.h.b16 %v387
  %v589 = vunpack.c.l.b16 %v388
  %v590 = vunpack.c.h.b16 %v388
  %v591 = vunpack.c.l.b16 %v389
  %v592 = vunpack.c.h.b16 %v389
  %v593 = vunpack.c.l.b16 %v390
  %v594 = vunpack.c.h.b16 %v390
  %v595 = vunpack.c.l.b16 %v391
  %v596 = vunpack.c.h.b16 %v391
  %v597 = vunpack.c.l.b16 %v392
  %v598 = vunpack.c.h.b16 %v392
  %v599 = vunpack.c.l.b16 %v393
  %v600 = vunpack.c.h.b16 %v393
  %v601 = vunpack.c.l.b16 %v394
  %v602 = vunpack.c.h.b16 %v394
  %v603 = vunpack.c.l.b16 %v395
  %v604 = vunpack.c.h.b16 %v395
  %v605 = vunpack.c.l.b16 %v396
  %v606 = vunpack.c.h.b16 %v396
  %v607 = vunpack.c.l.b16 %v397
  %v608 = vunpack.c.h.b16 %v397
  %v609 = vunpack.c.l.b16 %v398
  %v610 = vunpack.c.h.b16 %v398
  %v611 = vunpack.c.l.b16 %v399
  %v612 = vunpack.c.h.b16 %v399
  %v613 = vunpack.c.l.b16 %v400
  %v614 = vunpack.c.h.b16 %v400
  %v615 = vunpack.c.l.b16 %v401
  %v616 = vunpack.c.h.b16 %v401
  %v617 = vunpack.c.l.b16 %v402
  %v618 = vunpack.c.h.b16 %v402
  %v619 = vunpack.c.l.b16 %v403
  %v620 = vunpack.c.h.b16 %v403
  %v621 = vunpack.c.l.b16 %v404
  %v622 = vunpack.c.h.b16 %v404
  %v623 = vunpack.c.l.b16 %v405
  %v624 = vunpack.c.h.b16 %v405
  %v625 = vunpack.c.l.b16 %v406
  %v626 = vunpack.c.h.b16 %v406
  %v627 = vunpack.c.l.b16 %v407
  %v628 = vunpack.c.h.b16 %v407
  %v629 = vunpack.c.l.b16 %v408
  %v630 = vunpack.c.h.b16 %v408
  %v631 = vunpack.c.l.b16 %v409
  %v632 = vunpack.c.h.b16 %v409
  %v633 = vunpack.c.l.b16 %v410
  %v634 = vunpack.c.h.b16 %v410
  %v635 = vunpack.c.l.b16 %v411
  %v636 = vunpack.c.h.b16 %v411
  %v637 = vunpack.c.l.b16 %v412
  %v638 = vunpack.c.h.b16 %v412
  %v639 = vunpack.c.l.b16 %v413
  %v640 = vunpack.c.h.b16 %v413
  %v641 = vunpack.c.l.b16 %v414
  %v642 = vunpack.c.h.b16 %v414
  %v643 = vunpack.c.l.b16 %v415
  %v644 = vunpack.c.h.b16 %v415
  %v645 = vunpack.c.l.b16 %v416
  %v646 = vunpack.c.h.b16 %v416
  %v647 = vunpack.c.l.b16 %v417
  %v648 = vunpack.c.h.b16 %v417
  %v649 = vunpack.c.l.b16 %v418
  %v650 = vunpack.c.h.b16 %v418
  %v651 = vunpack.c.l.b16 %v419
  %v652 = vunpack.c.h.b16 %v419
  %v653 = vunpack.c.l.b16 %v420
  %v654 = vunpack.c.h.b16 %v420
  %v655 = vunpack.c.l.b16 %v421
  %v656 = vunpack.c.h.b16 %v421
  %v657 = vunpack.c.l.b16 %v422
  %v658 = vunpack.c.h.b16 %v422
  %v659 = vunpack.c.l.b16 %v423
  %v660 = vunpack.c.h.b16 %v423
  %v661 = vunpack.c.l.b16 %v424
  %v662 = vunpack.c.h.b16 %v424
  %v663 = vunpack.c.l.b16 %v425
  %v664 = vunpack.c.h.b16 %v425
  %v665 = vunpack.c.l.b16 %v426
  %v666 = vunpack.c.h.b16 %v426
  %v667 = vunpack.c.l.b16 %v427
  %v668 = vunpack.c.h.b16 %v427
  %v669 = vunpack.c.l.b16 %v428
  %v670 = vunpack.c.h.b16 %v428
  %v671 = vunpack.c.l.b16 %v429
  %v672 = vunpack.c.h.b16 %v429
  %v673 = vunpack.c.l.b16 %v430
  %v674 = vunpack.c.h.b16 %v430
  %v675 = vunpack.c.l.b16 %v431
  %v676 = vunpack.c.h.b16 %v431
  %v677 = vunpack.c.l.b16 %v432
  %v678 = vunpack.c.h.b16 %v432
  %v679 = vunpack.c.l.b16 %v433
  %v680 = vunpack.c.h.b16 %v433
  %v681 = vunpack.c.l.b16 %v434
  %v682 = vunpack.c.h.b16 %v434
  %v683 = vunpack.c.l.b16 %v435
  %v684 = vunpack.c.h.b16 %v435
  %v685 = vunpack.c.l.b16 %v436
  %v686 = vunpack.c.h.b16 %v436
  %v687 = vunpack.c.l.b16 %v437
  %v688 = vunpack.c.h.b16 %v437
  %v689 = vunpack.c.l.b16 %v438
  %v690 = vunpack.c.h.b16 %v438
  %v691 = vpack.c.b16 %v533, %v531
  %v692 = vpack.c.b16 %v534, %v532
  %v693 = vpack.c.b16 %v537, %v535
  %v694 = vpack.c.b16 %v538, %v536
  %v695 = vpack.c.b16 %v541, %v539
  %v696 = vpack.c.b16 %v542, %v540
  %v697 = vpack.c.b16 %v545, %v543
  %v698 = vpack.c.b16 %v546, %v544
  %v699 = vpack.c.b16 %v549, %v547
  %v700 = vpack.c.b16 %v550, %v548
  %v701 = vpack.c.b16 %v553, %v551
  %v702 = vpack.c.b16 %v554, %v552
  %v703 = vpack.c.b16 %v557, %v555
  %v704 = vpack.c.b16 %v558, %v556
  %v705 = vpack.c.b16 %v561, %v559
  %v706 = vpack.c.b16 %v562, %v560
  %v707 = vpack.c.b16 %v565, %v563
  %v708 = vpack.c.b16 %v566, %v564
  %v709 = vpack.c.b16 %v569, %v567
  %v710 = vpack.c.b16 %v570, %v568
  %v711 = vpack.c.b16 %v573, %v571
  %v712 = vpack.c.b16 %v574, %v572
  %v713 = vpack.c.b16 %v577, %v575
  %v714 = vpack.c.b16 %v578, %v576
  %v715 = vpack.c.b16 %v581, %v579
  %v716 = vpack.c.b16 %v582, %v580
  %v717 = vpack.c.b16 %v585, %v583
  %v718 = vpack.c.b16 %v586, %v584
  %v719 = vpack.c.b16 %v589, %v587
  %v720 = vpack.c.b16 %v590, %v588
  %v721 = vpack.c.b16 %v593, %v591
  %v722 = vpack.c.b16 %v594, %v592
  %v723 = vpack.c.b16 %v597, %v595
  %v724 = vpack.c.b16 %v598, %v596
  %v725 = vpack.c.b16 %v601, %v599
  %v726 = vpack.c.b16 %v602, %v600
  %v727 = vpack.c.b16 %v605, %v603
  %v728 = vpack.c.b16 %v606, %v604
  %v729 = vpack.c.b16 %v609, %v607
  %v730 = vpack.c.b16 %v610, %v608
  %v731 = vpack.c.b16 %v613, %v611
  %v732 = vpack.c.b16 %v614, %v612
  %v733 = vpack.c.b16 %v617, %v615
  %v734 = vpack.c.b16 %v618, %v616
  %v735 = vpack.c.b16 %v621, %v619
  %v736 = vpack.c.b16 %v622, %v620
  %v737 = vpack.c.b16 %v625, %v623
  %v738 = vpack.c.b16 %v626, %v624
  %v739 = vpack.c.b16 %v629, %v627
  %v740 = vpack.c.b16 %v630, %v628
  %v741 = vpack.c.b16 %v633, %v631
  %v742 = vpack.c.b16 %v634, %v632
  %v743 = vpack.c.b16 %v637, %v635
  %v744 = vpack.c.b16 %v638, %v636
  %v745 = vpack.c.b16 %v641, %v639
  %v746 = vpack.c.b16 %v642, %v640
  %v747 = vpack.c.b16 %v645, %v643
  %v748 = vpack.c.b16 %v646, %v644
  %v749 = vpack.c.b16 %v649, %v647
  %v750 = vpack.c.b16 %v650, %v648
  %v751 = vpack.c.b16 %v653, %v651
  %v752 = vpack.c.b16 %v654, %v652
  %v753 = vpack.c.b16 %v657, %v655
  %v754 = vpack.c.b16 %v658, %v656
  %v755 = vpack.c.b16 %v661, %v659
  %v756 = vpack.c.b16 %v662, %v660
  %v757 = vpack.c.b16 %v665, %v663
  %v758 = vpack.c.b16 %v666, %v664
  %v759 = vpack.c.b16 %v669, %v667
  %v760 = vpack.c.b16 %v670, %v668
  %v761 = vpack.c.b16 %v673, %v671
  %v762 = vpack.c.b16 %v674, %v672
  %v763 = vpack.c.b16 %v677, %v675
  %v764 = vpack.c.b16 %v678, %v676
  %v765 = vpack.c.b16 %v681, %v679
  %v766 = vpack.c.b16 %v682, %v680
  %v767 = vpack.c.b16 %v685, %v683
  %v768 = vpack.c.b16 %v686, %v684
  %v769 = vpack.c.b16 %v689, %v687
  %v770 = vpack.c.b16 %v690, %v688
  %851 = vmatprep.subr.bf16.mxu0 %v692
  %852 = vmatpush1.bf16.msra.mxu0 %v691
  %853 = vmatprep.subr.bf16.mxu0 %v694
  %854 = vmatpush1.bf16.msra.mxu0 %v693
  %855 = vmatprep.subr.bf16.mxu0 %v696
  %856 = vmatpush1.bf16.msra.mxu0 %v695
  %857 = vmatprep.subr.bf16.mxu0 %v698
  %858 = vmatpush1.bf16.msra.mxu0 %v697
  %859 = vmatprep.subr.bf16.mxu0 %v700
  %860 = vmatpush1.bf16.msra.mxu0 %v699
  %861 = vmatprep.subr.bf16.mxu0 %v702
  %862 = vmatpush1.bf16.msra.mxu0 %v701
  %863 = vmatprep.subr.bf16.mxu0 %v704
  %864 = vmatpush1.bf16.msra.mxu0 %v703
  %865 = vmatprep.subr.bf16.mxu0 %v706
  %866 = vmatpush1.bf16.msra.mxu0 %v705
  %867 = vmatprep.subr.bf16.mxu0 %v708
  %868 = vmatpush1.bf16.msra.mxu0 %v707
  %869 = vmatprep.subr.bf16.mxu0 %v710
  %870 = vmatpush1.bf16.msra.mxu0 %v709
  %871 = vmatprep.subr.bf16.mxu0 %v712
  %872 = vmatpush1.bf16.msra.mxu0 %v711
  %873 = vmatprep.subr.bf16.mxu0 %v714
  %874 = vmatpush1.bf16.msra.mxu0 %v713
  %875 = vmatprep.subr.bf16.mxu0 %v716
  %876 = vmatpush1.bf16.msra.mxu0 %v715
  %877 = vmatprep.subr.bf16.mxu0 %v718
  %878 = vmatpush1.bf16.msra.mxu0 %v717
  %879 = vmatprep.subr.bf16.mxu0 %v720
  %880 = vmatpush1.bf16.msra.mxu0 %v719
  %881 = vmatprep.subr.bf16.mxu0 %v722
  %882 = vmatpush1.bf16.msra.mxu0 %v721
  %883 = vmatprep.mubr.bf16.mxu0 %v350
  %884 = vmatmul.mubr.bf16.gmra.mrb[0].mxu0 %v349
  %v885 = vpop.f32.mrb[0].mxu0
  %v886 = vadd.f32 %v444, %v885
  %v887 = vpop.f32.mrb[0].mxu0
  %v888 = vadd.f32 %v448, %v887
  %v889 = vpop.f32.mrb[0].mxu0
  %v890 = vadd.f32 %v444, %v889
  %v891 = vpop.f32.mrb[0].mxu0
  %v892 = vadd.f32 %v448, %v891
  %893 = vmatprep.mubr.bf16.mxu0 %v355
  %894 = vmatmul.mubr.bf16.gmra.mrb[0].mxu0 %v354
  %v895 = vpop.f32.mrb[0].mxu0
  %v896 = vadd.f32 %v444, %v895
  %v897 = vpop.f32.mrb[0].mxu0
  %v898 = vadd.f32 %v448, %v897
  %v899 = vpop.f32.mrb[0].mxu0
  %v900 = vadd.f32 %v444, %v899
  %v901 = vpop.f32.mrb[0].mxu0
  %v902 = vadd.f32 %v448, %v901
  %903 = vdwg.mxu0
  %904 = vmatprep.subr.bf16.mxu0 %v724
  %905 = vmatpush1.bf16.msra.mxu0 %v723
  %906 = vmatprep.subr.bf16.mxu0 %v726
  %907 = vmatpush1.bf16.msra.mxu0 %v725
  %908 = vmatprep.subr.bf16.mxu0 %v728
  %909 = vmatpush1.bf16.msra.mxu0 %v727
  %910 = vmatprep.subr.bf16.mxu0 %v730
  %911 = vmatpush1.bf16.msra.mxu0 %v729
  %912 = vmatprep.subr.bf16.mxu0 %v732
  %913 = vmatpush1.bf16.msra.mxu0 %v731
  %914 = vmatprep.subr.bf16.mxu0 %v734
  %915 = vmatpush1.bf16.msra.mxu0 %v733
  %916 = vmatprep.subr.bf16.mxu0 %v736
  %917 = vmatpush1.bf16.msra.mxu0 %v735
  %918 = vmatprep.subr.bf16.mxu0 %v738
  %919 = vmatpush1.bf16.msra.mxu0 %v737
  %920 = vmatprep.subr.bf16.mxu0 %v740
  %921 = vmatpush1.bf16.msra.mxu0 %v739
  %922 = vmatprep.subr.bf16.mxu0 %v742
  %923 = vmatpush1.bf16.msra.mxu0 %v741
  %924 = vmatprep.subr.bf16.mxu0 %v744
  %925 = vmatpush1.bf16.msra.mxu0 %v743
  %926 = vmatprep.subr.bf16.mxu0 %v746
  %927 = vmatpush1.bf16.msra.mxu0 %v745
  %928 = vmatprep.subr.bf16.mxu0 %v748
  %929 = vmatpush1.bf16.msra.mxu0 %v747
  %930 = vmatprep.subr.bf16.mxu0 %v750
  %931 = vmatpush1.bf16.msra.mxu0 %v749
  %932 = vmatprep.subr.bf16.mxu0 %v752
  %933 = vmatpush1.bf16.msra.mxu0 %v751
  %934 = vmatprep.subr.bf16.mxu0 %v754
  %935 = vmatpush1.bf16.msra.mxu0 %v753
  %936 = vmatprep.mubr.bf16.mxu0 %v352
  %937 = vmatmul.mubr.bf16.gmra.mrb[0].mxu0 %v351
  %v938 = vpop.f32.mrb[0].mxu0
  %v939 = vadd.f32 %v886, %v938
  %v940 = vpop.f32.mrb[0].mxu0
  %v941 = vadd.f32 %v888, %v940
  %v942 = vpop.f32.mrb[0].mxu0
  %v943 = vadd.f32 %v890, %v942
  %v944 = vpop.f32.mrb[0].mxu0
  %v945 = vadd.f32 %v892, %v944
  %946 = vmatprep.mubr.bf16.mxu0 %v357
  %947 = vmatmul.mubr.bf16.gmra.mrb[0].mxu0 %v356
  %v948 = vpop.f32.mrb[0].mxu0
  %v949 = vadd.f32 %v896, %v948
  %v950 = vpop.f32.mrb[0].mxu0
  %v951 = vadd.f32 %v898, %v950
  %v952 = vpop.f32.mrb[0].mxu0
  %v953 = vadd.f32 %v900, %v952
  %v954 = vpop.f32.mrb[0].mxu0
  %v955 = vadd.f32 %v902, %v954
  %956 = vdwg.mxu0
  %957 = vmatprep.subr.bf16.mxu0 %v756
  %958 = vmatpush1.bf16.msra.mxu0 %v755
  %959 = vmatprep.subr.bf16.mxu0 %v758
  %960 = vmatpush1.bf16.msra.mxu0 %v757
  %961 = vmatprep.subr.bf16.mxu0 %v760
  %962 = vmatpush1.bf16.msra.mxu0 %v759
  %963 = vmatprep.subr.bf16.mxu0 %v762
  %964 = vmatpush1.bf16.msra.mxu0 %v761
  %965 = vmatprep.subr.bf16.mxu0 %v764
  %966 = vmatpush1.bf16.msra.mxu0 %v763
  %967 = vmatprep.subr.bf16.mxu0 %v766
  %968 = vmatpush1.bf16.msra.mxu0 %v765
  %969 = vmatprep.subr.bf16.mxu0 %v768
  %970 = vmatpush1.bf16.msra.mxu0 %v767
  %971 = vmatprep.subr.bf16.mxu0 %v770
  %972 = vmatpush1.bf16.msra.mxu0 %v769
  %973 = vmatprep.subr.bf16.mxu0 0
  %974 = vmatpush1.bf16.msra.mxu0 0
  %975 = vmatprep.subr.bf16.mxu0 0
  %976 = vmatpush1.bf16.msra.mxu0 0
  %977 = vmatprep.subr.bf16.mxu0 0
  %978 = vmatpush1.bf16.msra.mxu0 0
  %979 = vmatprep.subr.bf16.mxu0 0
  %980 = vmatpush1.bf16.msra.mxu0 0
  %981 = vmatprep.subr.bf16.mxu0 0
  %982 = vmatpush1.bf16.msra.mxu0 0
  %983 = vmatprep.subr.bf16.mxu0 0
  %984 = vmatpush1.bf16.msra.mxu0 0
  %985 = vmatprep.subr.bf16.mxu0 0
  %986 = vmatpush1.bf16.msra.mxu0 0
  %987 = vmatprep.subr.bf16.mxu0 0
  %988 = vmatpush1.bf16.msra.mxu0 0
  %989 = vmatprep.mubr.bf16.mxu0 0
  %990 = vmatmul.mubr.bf16.gmra.mrb[0].mxu0 %v353
  %v991 = vpop.f32.mrb[0].mxu0
  %v992 = vadd.f32 %v939, %v991
  %v993 = vpop.f32.mrb[0].mxu0
  %v994 = vadd.f32 %v941, %v993
  %v995 = vpop.f32.mrb[0].mxu0
  %v996 = vadd.f32 %v943, %v995
  %v997 = vpop.f32.mrb[0].mxu0
  %v998 = vadd.f32 %v945, %v997
  %999 = vmatprep.mubr.bf16.mxu0 0
  %1000 = vmatmul.mubr.bf16.gmra.mrb[0].mxu0 %v358
  %v1001 = vpop.f32.mrb[0].mxu0
  %v1002 = vadd.f32 %v949, %v1001
  %v1003 = vpop.f32.mrb[0].mxu0
  %v1004 = vadd.f32 %v951, %v1003
  %v1005 = vpop.f32.mrb[0].mxu0
  %v1006 = vadd.f32 %v953, %v1005
  %v1007 = vpop.f32.mrb[0].mxu0
  %v1008 = vadd.f32 %v955, %v1007
  %1009 = vdwg.mxu0
  %v1010 = vxor.u32 %v994, 2147483648
  %v1011 = vxor.u32 %v998, 2147483648
  %v1012 = vxor.u32 %v1004, 2147483648
  %v1013 = vxor.u32 %v1008, 2147483648
  %v1014 = vmul.f32 %v1010, 1.442695
  %v1015 = vpow.pop %v1014
  %v1016 = vmul.f32 %v1011, 1.442695
  %v1017 = vpow.pop %v1016
  %v1018 = vmul.f32 %v1012, 1.442695
  %v1019 = vpow.pop %v1018
  %v1020 = vmul.f32 %v1013, 1.442695
  %v1021 = vpow.pop %v1020
  %v1022 = vadd.f32 %v1015, 1.0
  %v1023 = vadd.f32 %v1017, 1.0
  %v1024 = vadd.f32 %v1019, 1.0
  %v1025 = vadd.f32 %v1021, 1.0
  %v1026 = vrcp.pop %v1022
  %v1027 = vmul.f32 1.0, %v1026
  %v1028 = vrcp.pop %v1023
  %v1029 = vmul.f32 1.0, %v1028
  %v1030 = vrcp.pop %v1024
  %v1031 = vmul.f32 1.0, %v1030
  %v1032 = vrcp.pop %v1025
  %v1033 = vmul.f32 1.0, %v1032
  %v1034 = vmul.f32 %v992, %v1027
  %v1035 = vmul.f32 %v996, %v1029
  %v1036 = vmul.f32 %v1002, %v1031
  %v1037 = vmul.f32 %v1006, %v1033
  %v1038 = vadd.f32 %v1034, %v144
  %v1039 = vadd.f32 %v1035, %v145
  %v1040 = vadd.f32 %v1036, %v146
  %v1041 = vadd.f32 %v1037, %v147
  %v1042 = vmul.f32 %v1038, 0.70710677
  %v1043 = vmul.f32 %v1039, 0.70710677
  %v1044 = vmul.f32 %v1040, 0.70710677
  %v1045 = vmul.f32 %v1041, 0.70710677
  %v1046 = vrot.slane %v1042, 6
  %v1047 = vrot.slane %v1043, 6
  %v1048 = vrot.slane %v1044, 6
  %v1049 = vrot.slane %v1045, 6
  %v1050 = vsel %vm269, %v1048, %v1049
  %v1051 = vsel %vm269, %v1047, %v1048
  %v1052 = vsel %vm269, %v1046, %v1047
  %v1053 = vsel %vm269, %v1049, %v1046
  %v1054 = vsel %vm278, %v1053, 0.0
  %v1055 = vsel %vm279, %v1052, 0.0
  %v1056 = vsel %vm280, %v1051, 0.0
  %v1057 = vsel %vm281, %v1050, 0.0
  %v1058 = vrot.slane %v1042, 7
  %v1059 = vrot.slane %v1043, 7
  %v1060 = vrot.slane %v1044, 7
  %v1061 = vrot.slane %v1045, 7
  %v1062 = vsel %vm290, %v1060, %v1061
  %v1063 = vsel %vm290, %v1059, %v1060
  %v1064 = vsel %vm290, %v1058, %v1059
  %v1065 = vsel %vm290, %v1061, %v1058
  %v1066 = vsel %vm299, %v1065, 0.0
  %v1067 = vsel %vm300, %v1064, 0.0
  %v1068 = vsel %vm301, %v1063, 0.0
  %v1069 = vsel %vm302, %v1062, 0.0
  %v1070 = vrot.slane %v1042, 1
  %v1071 = vrot.slane %v1043, 1
  %v1072 = vrot.slane %v1044, 1
  %v1073 = vrot.slane %v1045, 1
  %v1074 = vsel %vm311, %v1072, %v1073
  %v1075 = vsel %vm311, %v1071, %v1072
  %v1076 = vsel %vm311, %v1070, %v1071
  %v1077 = vsel %vm311, %v1073, %v1070
  %v1078 = vsel %vm320, %v1076, 0.0
  %v1079 = vsel %vm321, %v1075, 0.0
  %v1080 = vsel %vm322, %v1074, 0.0
  %v1081 = vsel %vm323, %v1077, 0.0
  %v1082 = vrot.slane %v1042, 2
  %v1083 = vrot.slane %v1043, 2
  %v1084 = vrot.slane %v1044, 2
  %v1085 = vrot.slane %v1045, 2
  %v1086 = vsel %vm332, %v1084, %v1085
  %v1087 = vsel %vm332, %v1083, %v1084
  %v1088 = vsel %vm332, %v1082, %v1083
  %v1089 = vsel %vm332, %v1085, %v1082
  %v1090 = vsel %vm341, %v1088, 0.0
  %v1091 = vsel %vm342, %v1087, 0.0
  %v1092 = vsel %vm343, %v1086, 0.0
  %v1093 = vsel %vm344, %v1089, 0.0
  %v1094 = vpack.c.bf16 %v1055, %v1054
  %v1095 = vpack.c.bf16 %v1067, %v1066
  %v1096 = vpack.c.bf16 %v1043, %v1042
  %v1097 = vpack.c.bf16 %v1079, %v1078
  %v1098 = vpack.c.bf16 %v1091, %v1090
  %v1099 = vpack.c.bf16 %v1057, %v1056
  %v1100 = vpack.c.bf16 %v1069, %v1068
  %v1101 = vpack.c.bf16 %v1045, %v1044
  %v1102 = vpack.c.bf16 %v1081, %v1080
  %v1103 = vpack.c.bf16 %v1093, %v1092
  %s1104 = scalar_lea.vmem %s3, 640
  %v1105 = vld [vmem:[%s1104] sm:$0xff]
  %v1106 = vld [vmem:[%s1104 + $0x8] sm:$0xff]
  %v1107 = vld [vmem:[%s1104 + $0x10] sm:$0xff]
  %v1108 = vld [vmem:[%s1104 + $0x18] sm:$0xff]
  %v1109 = vld [vmem:[%s1104 + $0x20] sm:$0xff]
  %v1110 = vld [vmem:[%s1104 + $0x28] sm:$0xff]
  %v1111 = vld [vmem:[%s1104 + $0x30] sm:$0xff]
  %v1112 = vld [vmem:[%s1104 + $0x38] sm:$0xff]
  %v1113 = vld [vmem:[%s1104 + $0x40] sm:$0xff]
  %v1114 = vld [vmem:[%s1104 + $0x48] sm:$0xff]
  %v1115 = vld [vmem:[%s1104 + $0x50] sm:$0xff]
  %v1116 = vld [vmem:[%s1104 + $0x58] sm:$0xff]
  %v1117 = vld [vmem:[%s1104 + $0x60] sm:$0xff]
  %v1118 = vld [vmem:[%s1104 + $0x68] sm:$0xff]
  %v1119 = vld [vmem:[%s1104 + $0x70] sm:$0xff]
  %v1120 = vld [vmem:[%s1104 + $0x78] sm:$0xff]
  %v1121 = vld [vmem:[%s1104 + $0x80] sm:$0xff]
  %v1122 = vld [vmem:[%s1104 + $0x88] sm:$0xff]
  %v1123 = vld [vmem:[%s1104 + $0x90] sm:$0xff]
  %v1124 = vld [vmem:[%s1104 + $0x98] sm:$0xff]
  %v1125 = vld [vmem:[%s1104 + $0xa0] sm:$0xff]
  %v1126 = vld [vmem:[%s1104 + $0xa8] sm:$0xff]
  %v1127 = vld [vmem:[%s1104 + $0xb0] sm:$0xff]
  %v1128 = vld [vmem:[%s1104 + $0xb8] sm:$0xff]
  %v1129 = vld [vmem:[%s1104 + $0xc0] sm:$0xff]
  %v1130 = vld [vmem:[%s1104 + $0xc8] sm:$0xff]
  %v1131 = vld [vmem:[%s1104 + $0xd0] sm:$0xff]
  %v1132 = vld [vmem:[%s1104 + $0xd8] sm:$0xff]
  %v1133 = vld [vmem:[%s1104 + $0xe0] sm:$0xff]
  %v1134 = vld [vmem:[%s1104 + $0xe8] sm:$0xff]
  %v1135 = vld [vmem:[%s1104 + $0xf0] sm:$0xff]
  %v1136 = vld [vmem:[%s1104 + $0xf8] sm:$0xff]
  %v1137 = vld [vmem:[%s1104 + $0x100] sm:$0xff]
  %v1138 = vld [vmem:[%s1104 + $0x108] sm:$0xff]
  %v1139 = vld [vmem:[%s1104 + $0x110] sm:$0xff]
  %v1140 = vld [vmem:[%s1104 + $0x118] sm:$0xff]
  %v1141 = vld [vmem:[%s1104 + $0x120] sm:$0xff]
  %v1142 = vld [vmem:[%s1104 + $0x128] sm:$0xff]
  %v1143 = vld [vmem:[%s1104 + $0x130] sm:$0xff]
  %v1144 = vld [vmem:[%s1104 + $0x138] sm:$0xff]
  %v1145 = vld [vmem:[%s1104 + $0x140] sm:$0xff]
  %v1146 = vld [vmem:[%s1104 + $0x148] sm:$0xff]
  %v1147 = vld [vmem:[%s1104 + $0x150] sm:$0xff]
  %v1148 = vld [vmem:[%s1104 + $0x158] sm:$0xff]
  %v1149 = vld [vmem:[%s1104 + $0x160] sm:$0xff]
  %v1150 = vld [vmem:[%s1104 + $0x168] sm:$0xff]
  %v1151 = vld [vmem:[%s1104 + $0x170] sm:$0xff]
  %v1152 = vld [vmem:[%s1104 + $0x178] sm:$0xff]
  %v1153 = vld [vmem:[%s1104 + $0x180] sm:$0xff]
  %v1154 = vld [vmem:[%s1104 + $0x188] sm:$0xff]
  %v1155 = vld [vmem:[%s1104 + $0x190] sm:$0xff]
  %v1156 = vld [vmem:[%s1104 + $0x198] sm:$0xff]
  %v1157 = vld [vmem:[%s1104 + $0x1a0] sm:$0xff]
  %v1158 = vld [vmem:[%s1104 + $0x1a8] sm:$0xff]
  %v1159 = vld [vmem:[%s1104 + $0x1b0] sm:$0xff]
  %v1160 = vld [vmem:[%s1104 + $0x1b8] sm:$0xff]
  %v1161 = vld [vmem:[%s1104 + $0x1c0] sm:$0xff]
  %v1162 = vld [vmem:[%s1104 + $0x1c8] sm:$0xff]
  %v1163 = vld [vmem:[%s1104 + $0x1d0] sm:$0xff]
  %v1164 = vld [vmem:[%s1104 + $0x1d8] sm:$0xff]
  %v1165 = vld [vmem:[%s1104 + $0x1e0] sm:$0xff]
  %v1166 = vld [vmem:[%s1104 + $0x1e8] sm:$0xff]
  %v1167 = vld [vmem:[%s1104 + $0x1f0] sm:$0xff]
  %v1168 = vld [vmem:[%s1104 + $0x1f8] sm:$0xff]
  %v1169 = vld [vmem:[%s1104 + $0x200] sm:$0xff]
  %v1170 = vld [vmem:[%s1104 + $0x208] sm:$0xff]
  %v1171 = vld [vmem:[%s1104 + $0x210] sm:$0xff]
  %v1172 = vld [vmem:[%s1104 + $0x218] sm:$0xff]
  %v1173 = vld [vmem:[%s1104 + $0x220] sm:$0xff]
  %v1174 = vld [vmem:[%s1104 + $0x228] sm:$0xff]
  %v1175 = vld [vmem:[%s1104 + $0x230] sm:$0xff]
  %v1176 = vld [vmem:[%s1104 + $0x238] sm:$0xff]
  %v1177 = vld [vmem:[%s1104 + $0x240] sm:$0xff]
  %v1178 = vld [vmem:[%s1104 + $0x248] sm:$0xff]
  %v1179 = vld [vmem:[%s1104 + $0x250] sm:$0xff]
  %v1180 = vld [vmem:[%s1104 + $0x258] sm:$0xff]
  %v1181 = vld [vmem:[%s1104 + $0x260] sm:$0xff]
  %v1182 = vld [vmem:[%s1104 + $0x268] sm:$0xff]
  %v1183 = vld [vmem:[%s1104 + $0x270] sm:$0xff]
  %v1184 = vld [vmem:[%s1104 + $0x278] sm:$0xff]
  %s1185 = scalar_lea.vmem %s4, 2
  %v1186 = vld [vmem:[%s1185] sm:$0x3]
  %v1188 = vlaneseq
  %v1189 = vshrl.u32 %v1188, 7
  %v1190 = vsub.s32 0, %v1189
  %v1191 = vrot.slane %v1186, %v1190
  %v1192 = vlaneseq
  %v1193 = vshrl.u32 %v1192, 7
  %v1194 = vsub.s32 1, %v1193
  %v1195 = vrot.slane %v1186, %v1194
  %v1278 = vunpack.c.l.b16 %v1105
  %v1279 = vunpack.c.h.b16 %v1105
  %v1280 = vunpack.c.l.b16 %v1106
  %v1281 = vunpack.c.h.b16 %v1106
  %v1282 = vunpack.c.l.b16 %v1107
  %v1283 = vunpack.c.h.b16 %v1107
  %v1284 = vunpack.c.l.b16 %v1108
  %v1285 = vunpack.c.h.b16 %v1108
  %v1286 = vunpack.c.l.b16 %v1109
  %v1287 = vunpack.c.h.b16 %v1109
  %v1288 = vunpack.c.l.b16 %v1110
  %v1289 = vunpack.c.h.b16 %v1110
  %v1290 = vunpack.c.l.b16 %v1111
  %v1291 = vunpack.c.h.b16 %v1111
  %v1292 = vunpack.c.l.b16 %v1112
  %v1293 = vunpack.c.h.b16 %v1112
  %v1294 = vunpack.c.l.b16 %v1113
  %v1295 = vunpack.c.h.b16 %v1113
  %v1296 = vunpack.c.l.b16 %v1114
  %v1297 = vunpack.c.h.b16 %v1114
  %v1298 = vunpack.c.l.b16 %v1115
  %v1299 = vunpack.c.h.b16 %v1115
  %v1300 = vunpack.c.l.b16 %v1116
  %v1301 = vunpack.c.h.b16 %v1116
  %v1302 = vunpack.c.l.b16 %v1117
  %v1303 = vunpack.c.h.b16 %v1117
  %v1304 = vunpack.c.l.b16 %v1118
  %v1305 = vunpack.c.h.b16 %v1118
  %v1306 = vunpack.c.l.b16 %v1119
  %v1307 = vunpack.c.h.b16 %v1119
  %v1308 = vunpack.c.l.b16 %v1120
  %v1309 = vunpack.c.h.b16 %v1120
  %v1310 = vunpack.c.l.b16 %v1121
  %v1311 = vunpack.c.h.b16 %v1121
  %v1312 = vunpack.c.l.b16 %v1122
  %v1313 = vunpack.c.h.b16 %v1122
  %v1314 = vunpack.c.l.b16 %v1123
  %v1315 = vunpack.c.h.b16 %v1123
  %v1316 = vunpack.c.l.b16 %v1124
  %v1317 = vunpack.c.h.b16 %v1124
  %v1318 = vunpack.c.l.b16 %v1125
  %v1319 = vunpack.c.h.b16 %v1125
  %v1320 = vunpack.c.l.b16 %v1126
  %v1321 = vunpack.c.h.b16 %v1126
  %v1322 = vunpack.c.l.b16 %v1127
  %v1323 = vunpack.c.h.b16 %v1127
  %v1324 = vunpack.c.l.b16 %v1128
  %v1325 = vunpack.c.h.b16 %v1128
  %v1326 = vunpack.c.l.b16 %v1129
  %v1327 = vunpack.c.h.b16 %v1129
  %v1328 = vunpack.c.l.b16 %v1130
  %v1329 = vunpack.c.h.b16 %v1130
  %v1330 = vunpack.c.l.b16 %v1131
  %v1331 = vunpack.c.h.b16 %v1131
  %v1332 = vunpack.c.l.b16 %v1132
  %v1333 = vunpack.c.h.b16 %v1132
  %v1334 = vunpack.c.l.b16 %v1133
  %v1335 = vunpack.c.h.b16 %v1133
  %v1336 = vunpack.c.l.b16 %v1134
  %v1337 = vunpack.c.h.b16 %v1134
  %v1338 = vunpack.c.l.b16 %v1135
  %v1339 = vunpack.c.h.b16 %v1135
  %v1340 = vunpack.c.l.b16 %v1136
  %v1341 = vunpack.c.h.b16 %v1136
  %v1342 = vunpack.c.l.b16 %v1137
  %v1343 = vunpack.c.h.b16 %v1137
  %v1344 = vunpack.c.l.b16 %v1138
  %v1345 = vunpack.c.h.b16 %v1138
  %v1346 = vunpack.c.l.b16 %v1139
  %v1347 = vunpack.c.h.b16 %v1139
  %v1348 = vunpack.c.l.b16 %v1140
  %v1349 = vunpack.c.h.b16 %v1140
  %v1350 = vunpack.c.l.b16 %v1141
  %v1351 = vunpack.c.h.b16 %v1141
  %v1352 = vunpack.c.l.b16 %v1142
  %v1353 = vunpack.c.h.b16 %v1142
  %v1354 = vunpack.c.l.b16 %v1143
  %v1355 = vunpack.c.h.b16 %v1143
  %v1356 = vunpack.c.l.b16 %v1144
  %v1357 = vunpack.c.h.b16 %v1144
  %v1358 = vunpack.c.l.b16 %v1145
  %v1359 = vunpack.c.h.b16 %v1145
  %v1360 = vunpack.c.l.b16 %v1146
  %v1361 = vunpack.c.h.b16 %v1146
  %v1362 = vunpack.c.l.b16 %v1147
  %v1363 = vunpack.c.h.b16 %v1147
  %v1364 = vunpack.c.l.b16 %v1148
  %v1365 = vunpack.c.h.b16 %v1148
  %v1366 = vunpack.c.l.b16 %v1149
  %v1367 = vunpack.c.h.b16 %v1149
  %v1368 = vunpack.c.l.b16 %v1150
  %v1369 = vunpack.c.h.b16 %v1150
  %v1370 = vunpack.c.l.b16 %v1151
  %v1371 = vunpack.c.h.b16 %v1151
  %v1372 = vunpack.c.l.b16 %v1152
  %v1373 = vunpack.c.h.b16 %v1152
  %v1374 = vunpack.c.l.b16 %v1153
  %v1375 = vunpack.c.h.b16 %v1153
  %v1376 = vunpack.c.l.b16 %v1154
  %v1377 = vunpack.c.h.b16 %v1154
  %v1378 = vunpack.c.l.b16 %v1155
  %v1379 = vunpack.c.h.b16 %v1155
  %v1380 = vunpack.c.l.b16 %v1156
  %v1381 = vunpack.c.h.b16 %v1156
  %v1382 = vunpack.c.l.b16 %v1157
  %v1383 = vunpack.c.h.b16 %v1157
  %v1384 = vunpack.c.l.b16 %v1158
  %v1385 = vunpack.c.h.b16 %v1158
  %v1386 = vunpack.c.l.b16 %v1159
  %v1387 = vunpack.c.h.b16 %v1159
  %v1388 = vunpack.c.l.b16 %v1160
  %v1389 = vunpack.c.h.b16 %v1160
  %v1390 = vunpack.c.l.b16 %v1161
  %v1391 = vunpack.c.h.b16 %v1161
  %v1392 = vunpack.c.l.b16 %v1162
  %v1393 = vunpack.c.h.b16 %v1162
  %v1394 = vunpack.c.l.b16 %v1163
  %v1395 = vunpack.c.h.b16 %v1163
  %v1396 = vunpack.c.l.b16 %v1164
  %v1397 = vunpack.c.h.b16 %v1164
  %v1398 = vunpack.c.l.b16 %v1165
  %v1399 = vunpack.c.h.b16 %v1165
  %v1400 = vunpack.c.l.b16 %v1166
  %v1401 = vunpack.c.h.b16 %v1166
  %v1402 = vunpack.c.l.b16 %v1167
  %v1403 = vunpack.c.h.b16 %v1167
  %v1404 = vunpack.c.l.b16 %v1168
  %v1405 = vunpack.c.h.b16 %v1168
  %v1406 = vunpack.c.l.b16 %v1169
  %v1407 = vunpack.c.h.b16 %v1169
  %v1408 = vunpack.c.l.b16 %v1170
  %v1409 = vunpack.c.h.b16 %v1170
  %v1410 = vunpack.c.l.b16 %v1171
  %v1411 = vunpack.c.h.b16 %v1171
  %v1412 = vunpack.c.l.b16 %v1172
  %v1413 = vunpack.c.h.b16 %v1172
  %v1414 = vunpack.c.l.b16 %v1173
  %v1415 = vunpack.c.h.b16 %v1173
  %v1416 = vunpack.c.l.b16 %v1174
  %v1417 = vunpack.c.h.b16 %v1174
  %v1418 = vunpack.c.l.b16 %v1175
  %v1419 = vunpack.c.h.b16 %v1175
  %v1420 = vunpack.c.l.b16 %v1176
  %v1421 = vunpack.c.h.b16 %v1176
  %v1422 = vunpack.c.l.b16 %v1177
  %v1423 = vunpack.c.h.b16 %v1177
  %v1424 = vunpack.c.l.b16 %v1178
  %v1425 = vunpack.c.h.b16 %v1178
  %v1426 = vunpack.c.l.b16 %v1179
  %v1427 = vunpack.c.h.b16 %v1179
  %v1428 = vunpack.c.l.b16 %v1180
  %v1429 = vunpack.c.h.b16 %v1180
  %v1430 = vunpack.c.l.b16 %v1181
  %v1431 = vunpack.c.h.b16 %v1181
  %v1432 = vunpack.c.l.b16 %v1182
  %v1433 = vunpack.c.h.b16 %v1182
  %v1434 = vunpack.c.l.b16 %v1183
  %v1435 = vunpack.c.h.b16 %v1183
  %v1436 = vunpack.c.l.b16 %v1184
  %v1437 = vunpack.c.h.b16 %v1184
  %v1438 = vpack.c.b16 %v1280, %v1278
  %v1439 = vpack.c.b16 %v1281, %v1279
  %v1440 = vpack.c.b16 %v1284, %v1282
  %v1441 = vpack.c.b16 %v1285, %v1283
  %v1442 = vpack.c.b16 %v1288, %v1286
  %v1443 = vpack.c.b16 %v1289, %v1287
  %v1444 = vpack.c.b16 %v1292, %v1290
  %v1445 = vpack.c.b16 %v1293, %v1291
  %v1446 = vpack.c.b16 %v1296, %v1294
  %v1447 = vpack.c.b16 %v1297, %v1295
  %v1448 = vpack.c.b16 %v1300, %v1298
  %v1449 = vpack.c.b16 %v1301, %v1299
  %v1450 = vpack.c.b16 %v1304, %v1302
  %v1451 = vpack.c.b16 %v1305, %v1303
  %v1452 = vpack.c.b16 %v1308, %v1306
  %v1453 = vpack.c.b16 %v1309, %v1307
  %v1454 = vpack.c.b16 %v1312, %v1310
  %v1455 = vpack.c.b16 %v1313, %v1311
  %v1456 = vpack.c.b16 %v1316, %v1314
  %v1457 = vpack.c.b16 %v1317, %v1315
  %v1458 = vpack.c.b16 %v1320, %v1318
  %v1459 = vpack.c.b16 %v1321, %v1319
  %v1460 = vpack.c.b16 %v1324, %v1322
  %v1461 = vpack.c.b16 %v1325, %v1323
  %v1462 = vpack.c.b16 %v1328, %v1326
  %v1463 = vpack.c.b16 %v1329, %v1327
  %v1464 = vpack.c.b16 %v1332, %v1330
  %v1465 = vpack.c.b16 %v1333, %v1331
  %v1466 = vpack.c.b16 %v1336, %v1334
  %v1467 = vpack.c.b16 %v1337, %v1335
  %v1468 = vpack.c.b16 %v1340, %v1338
  %v1469 = vpack.c.b16 %v1341, %v1339
  %v1470 = vpack.c.b16 %v1344, %v1342
  %v1471 = vpack.c.b16 %v1345, %v1343
  %v1472 = vpack.c.b16 %v1348, %v1346
  %v1473 = vpack.c.b16 %v1349, %v1347
  %v1474 = vpack.c.b16 %v1352, %v1350
  %v1475 = vpack.c.b16 %v1353, %v1351
  %v1476 = vpack.c.b16 %v1356, %v1354
  %v1477 = vpack.c.b16 %v1357, %v1355
  %v1478 = vpack.c.b16 %v1360, %v1358
  %v1479 = vpack.c.b16 %v1361, %v1359
  %v1480 = vpack.c.b16 %v1364, %v1362
  %v1481 = vpack.c.b16 %v1365, %v1363
  %v1482 = vpack.c.b16 %v1368, %v1366
  %v1483 = vpack.c.b16 %v1369, %v1367
  %v1484 = vpack.c.b16 %v1372, %v1370
  %v1485 = vpack.c.b16 %v1373, %v1371
  %v1486 = vpack.c.b16 %v1376, %v1374
  %v1487 = vpack.c.b16 %v1377, %v1375
  %v1488 = vpack.c.b16 %v1380, %v1378
  %v1489 = vpack.c.b16 %v1381, %v1379
  %v1490 = vpack.c.b16 %v1384, %v1382
  %v1491 = vpack.c.b16 %v1385, %v1383
  %v1492 = vpack.c.b16 %v1388, %v1386
  %v1493 = vpack.c.b16 %v1389, %v1387
  %v1494 = vpack.c.b16 %v1392, %v1390
  %v1495 = vpack.c.b16 %v1393, %v1391
  %v1496 = vpack.c.b16 %v1396, %v1394
  %v1497 = vpack.c.b16 %v1397, %v1395
  %v1498 = vpack.c.b16 %v1400, %v1398
  %v1499 = vpack.c.b16 %v1401, %v1399
  %v1500 = vpack.c.b16 %v1404, %v1402
  %v1501 = vpack.c.b16 %v1405, %v1403
  %v1502 = vpack.c.b16 %v1408, %v1406
  %v1503 = vpack.c.b16 %v1409, %v1407
  %v1504 = vpack.c.b16 %v1412, %v1410
  %v1505 = vpack.c.b16 %v1413, %v1411
  %v1506 = vpack.c.b16 %v1416, %v1414
  %v1507 = vpack.c.b16 %v1417, %v1415
  %v1508 = vpack.c.b16 %v1420, %v1418
  %v1509 = vpack.c.b16 %v1421, %v1419
  %v1510 = vpack.c.b16 %v1424, %v1422
  %v1511 = vpack.c.b16 %v1425, %v1423
  %v1512 = vpack.c.b16 %v1428, %v1426
  %v1513 = vpack.c.b16 %v1429, %v1427
  %v1514 = vpack.c.b16 %v1432, %v1430
  %v1515 = vpack.c.b16 %v1433, %v1431
  %v1516 = vpack.c.b16 %v1436, %v1434
  %v1517 = vpack.c.b16 %v1437, %v1435
  %1598 = vmatprep.subr.bf16.mxu0 %v1439
  %1599 = vmatpush1.bf16.msra.mxu0 %v1438
  %1600 = vmatprep.subr.bf16.mxu0 %v1441
  %1601 = vmatpush1.bf16.msra.mxu0 %v1440
  %1602 = vmatprep.subr.bf16.mxu0 %v1443
  %1603 = vmatpush1.bf16.msra.mxu0 %v1442
  %1604 = vmatprep.subr.bf16.mxu0 %v1445
  %1605 = vmatpush1.bf16.msra.mxu0 %v1444
  %1606 = vmatprep.subr.bf16.mxu0 %v1447
  %1607 = vmatpush1.bf16.msra.mxu0 %v1446
  %1608 = vmatprep.subr.bf16.mxu0 %v1449
  %1609 = vmatpush1.bf16.msra.mxu0 %v1448
  %1610 = vmatprep.subr.bf16.mxu0 %v1451
  %1611 = vmatpush1.bf16.msra.mxu0 %v1450
  %1612 = vmatprep.subr.bf16.mxu0 %v1453
  %1613 = vmatpush1.bf16.msra.mxu0 %v1452
  %1614 = vmatprep.subr.bf16.mxu0 %v1455
  %1615 = vmatpush1.bf16.msra.mxu0 %v1454
  %1616 = vmatprep.subr.bf16.mxu0 %v1457
  %1617 = vmatpush1.bf16.msra.mxu0 %v1456
  %1618 = vmatprep.subr.bf16.mxu0 %v1459
  %1619 = vmatpush1.bf16.msra.mxu0 %v1458
  %1620 = vmatprep.subr.bf16.mxu0 %v1461
  %1621 = vmatpush1.bf16.msra.mxu0 %v1460
  %1622 = vmatprep.subr.bf16.mxu0 %v1463
  %1623 = vmatpush1.bf16.msra.mxu0 %v1462
  %1624 = vmatprep.subr.bf16.mxu0 %v1465
  %1625 = vmatpush1.bf16.msra.mxu0 %v1464
  %1626 = vmatprep.subr.bf16.mxu0 %v1467
  %1627 = vmatpush1.bf16.msra.mxu0 %v1466
  %1628 = vmatprep.subr.bf16.mxu0 %v1469
  %1629 = vmatpush1.bf16.msra.mxu0 %v1468
  %1630 = vmatprep.mubr.bf16.mxu0 %v1095
  %1631 = vmatmul.mubr.bf16.gmra.mrb[0].mxu0 %v1094
  %v1632 = vpop.f32.mrb[0].mxu0
  %v1633 = vadd.f32 %v1191, %v1632
  %v1634 = vpop.f32.mrb[0].mxu0
  %v1635 = vadd.f32 %v1195, %v1634
  %v1636 = vpop.f32.mrb[0].mxu0
  %v1637 = vadd.f32 %v1191, %v1636
  %v1638 = vpop.f32.mrb[0].mxu0
  %v1639 = vadd.f32 %v1195, %v1638
  %1640 = vmatprep.mubr.bf16.mxu0 %v1100
  %1641 = vmatmul.mubr.bf16.gmra.mrb[0].mxu0 %v1099
  %v1642 = vpop.f32.mrb[0].mxu0
  %v1643 = vadd.f32 %v1191, %v1642
  %v1644 = vpop.f32.mrb[0].mxu0
  %v1645 = vadd.f32 %v1195, %v1644
  %v1646 = vpop.f32.mrb[0].mxu0
  %v1647 = vadd.f32 %v1191, %v1646
  %v1648 = vpop.f32.mrb[0].mxu0
  %v1649 = vadd.f32 %v1195, %v1648
  %1650 = vdwg.mxu0
  %1651 = vmatprep.subr.bf16.mxu0 %v1471
  %1652 = vmatpush1.bf16.msra.mxu0 %v1470
  %1653 = vmatprep.subr.bf16.mxu0 %v1473
  %1654 = vmatpush1.bf16.msra.mxu0 %v1472
  %1655 = vmatprep.subr.bf16.mxu0 %v1475
  %1656 = vmatpush1.bf16.msra.mxu0 %v1474
  %1657 = vmatprep.subr.bf16.mxu0 %v1477
  %1658 = vmatpush1.bf16.msra.mxu0 %v1476
  %1659 = vmatprep.subr.bf16.mxu0 %v1479
  %1660 = vmatpush1.bf16.msra.mxu0 %v1478
  %1661 = vmatprep.subr.bf16.mxu0 %v1481
  %1662 = vmatpush1.bf16.msra.mxu0 %v1480
  %1663 = vmatprep.subr.bf16.mxu0 %v1483
  %1664 = vmatpush1.bf16.msra.mxu0 %v1482
  %1665 = vmatprep.subr.bf16.mxu0 %v1485
  %1666 = vmatpush1.bf16.msra.mxu0 %v1484
  %1667 = vmatprep.subr.bf16.mxu0 %v1487
  %1668 = vmatpush1.bf16.msra.mxu0 %v1486
  %1669 = vmatprep.subr.bf16.mxu0 %v1489
  %1670 = vmatpush1.bf16.msra.mxu0 %v1488
  %1671 = vmatprep.subr.bf16.mxu0 %v1491
  %1672 = vmatpush1.bf16.msra.mxu0 %v1490
  %1673 = vmatprep.subr.bf16.mxu0 %v1493
  %1674 = vmatpush1.bf16.msra.mxu0 %v1492
  %1675 = vmatprep.subr.bf16.mxu0 %v1495
  %1676 = vmatpush1.bf16.msra.mxu0 %v1494
  %1677 = vmatprep.subr.bf16.mxu0 %v1497
  %1678 = vmatpush1.bf16.msra.mxu0 %v1496
  %1679 = vmatprep.subr.bf16.mxu0 %v1499
  %1680 = vmatpush1.bf16.msra.mxu0 %v1498
  %1681 = vmatprep.subr.bf16.mxu0 %v1501
  %1682 = vmatpush1.bf16.msra.mxu0 %v1500
  %1683 = vmatprep.mubr.bf16.mxu0 %v1097
  %1684 = vmatmul.mubr.bf16.gmra.mrb[0].mxu0 %v1096
  %v1685 = vpop.f32.mrb[0].mxu0
  %v1686 = vadd.f32 %v1633, %v1685
  %v1687 = vpop.f32.mrb[0].mxu0
  %v1688 = vadd.f32 %v1635, %v1687
  %v1689 = vpop.f32.mrb[0].mxu0
  %v1690 = vadd.f32 %v1637, %v1689
  %v1691 = vpop.f32.mrb[0].mxu0
  %v1692 = vadd.f32 %v1639, %v1691
  %1693 = vmatprep.mubr.bf16.mxu0 %v1102
  %1694 = vmatmul.mubr.bf16.gmra.mrb[0].mxu0 %v1101
  %v1695 = vpop.f32.mrb[0].mxu0
  %v1696 = vadd.f32 %v1643, %v1695
  %v1697 = vpop.f32.mrb[0].mxu0
  %v1698 = vadd.f32 %v1645, %v1697
  %v1699 = vpop.f32.mrb[0].mxu0
  %v1700 = vadd.f32 %v1647, %v1699
  %v1701 = vpop.f32.mrb[0].mxu0
  %v1702 = vadd.f32 %v1649, %v1701
  %1703 = vdwg.mxu0
  %1704 = vmatprep.subr.bf16.mxu0 %v1503
  %1705 = vmatpush1.bf16.msra.mxu0 %v1502
  %1706 = vmatprep.subr.bf16.mxu0 %v1505
  %1707 = vmatpush1.bf16.msra.mxu0 %v1504
  %1708 = vmatprep.subr.bf16.mxu0 %v1507
  %1709 = vmatpush1.bf16.msra.mxu0 %v1506
  %1710 = vmatprep.subr.bf16.mxu0 %v1509
  %1711 = vmatpush1.bf16.msra.mxu0 %v1508
  %1712 = vmatprep.subr.bf16.mxu0 %v1511
  %1713 = vmatpush1.bf16.msra.mxu0 %v1510
  %1714 = vmatprep.subr.bf16.mxu0 %v1513
  %1715 = vmatpush1.bf16.msra.mxu0 %v1512
  %1716 = vmatprep.subr.bf16.mxu0 %v1515
  %1717 = vmatpush1.bf16.msra.mxu0 %v1514
  %1718 = vmatprep.subr.bf16.mxu0 %v1517
  %1719 = vmatpush1.bf16.msra.mxu0 %v1516
  %1720 = vmatprep.subr.bf16.mxu0 0
  %1721 = vmatpush1.bf16.msra.mxu0 0
  %1722 = vmatprep.subr.bf16.mxu0 0
  %1723 = vmatpush1.bf16.msra.mxu0 0
  %1724 = vmatprep.subr.bf16.mxu0 0
  %1725 = vmatpush1.bf16.msra.mxu0 0
  %1726 = vmatprep.subr.bf16.mxu0 0
  %1727 = vmatpush1.bf16.msra.mxu0 0
  %1728 = vmatprep.subr.bf16.mxu0 0
  %1729 = vmatpush1.bf16.msra.mxu0 0
  %1730 = vmatprep.subr.bf16.mxu0 0
  %1731 = vmatpush1.bf16.msra.mxu0 0
  %1732 = vmatprep.subr.bf16.mxu0 0
  %1733 = vmatpush1.bf16.msra.mxu0 0
  %1734 = vmatprep.subr.bf16.mxu0 0
  %1735 = vmatpush1.bf16.msra.mxu0 0
  %1736 = vmatprep.mubr.bf16.mxu0 0
  %1737 = vmatmul.mubr.bf16.gmra.mrb[0].mxu0 %v1098
  %v1738 = vpop.f32.mrb[0].mxu0
  %v1739 = vadd.f32 %v1686, %v1738
  %v1740 = vpop.f32.mrb[0].mxu0
  %v1741 = vadd.f32 %v1688, %v1740
  %v1742 = vpop.f32.mrb[0].mxu0
  %v1743 = vadd.f32 %v1690, %v1742
  %v1744 = vpop.f32.mrb[0].mxu0
  %v1745 = vadd.f32 %v1692, %v1744
  %1746 = vmatprep.mubr.bf16.mxu0 0
  %1747 = vmatmul.mubr.bf16.gmra.mrb[0].mxu0 %v1103
  %v1748 = vpop.f32.mrb[0].mxu0
  %v1749 = vadd.f32 %v1696, %v1748
  %v1750 = vpop.f32.mrb[0].mxu0
  %v1751 = vadd.f32 %v1698, %v1750
  %v1752 = vpop.f32.mrb[0].mxu0
  %v1753 = vadd.f32 %v1700, %v1752
  %v1754 = vpop.f32.mrb[0].mxu0
  %v1755 = vadd.f32 %v1702, %v1754
  %1756 = vdwg.mxu0
  %v1757 = vxor.u32 %v1741, 2147483648
  %v1758 = vxor.u32 %v1745, 2147483648
  %v1759 = vxor.u32 %v1751, 2147483648
  %v1760 = vxor.u32 %v1755, 2147483648
  %v1761 = vmul.f32 %v1757, 1.442695
  %v1762 = vpow.pop %v1761
  %v1763 = vmul.f32 %v1758, 1.442695
  %v1764 = vpow.pop %v1763
  %v1765 = vmul.f32 %v1759, 1.442695
  %v1766 = vpow.pop %v1765
  %v1767 = vmul.f32 %v1760, 1.442695
  %v1768 = vpow.pop %v1767
  %v1769 = vadd.f32 %v1762, 1.0
  %v1770 = vadd.f32 %v1764, 1.0
  %v1771 = vadd.f32 %v1766, 1.0
  %v1772 = vadd.f32 %v1768, 1.0
  %v1773 = vrcp.pop %v1769
  %v1774 = vmul.f32 1.0, %v1773
  %v1775 = vrcp.pop %v1770
  %v1776 = vmul.f32 1.0, %v1775
  %v1777 = vrcp.pop %v1771
  %v1778 = vmul.f32 1.0, %v1777
  %v1779 = vrcp.pop %v1772
  %v1780 = vmul.f32 1.0, %v1779
  %v1781 = vmul.f32 %v1739, %v1774
  %v1782 = vmul.f32 %v1743, %v1776
  %v1783 = vmul.f32 %v1749, %v1778
  %v1784 = vmul.f32 %v1753, %v1780
  %v1785 = vadd.f32 %v1781, %v1042
  %v1786 = vadd.f32 %v1782, %v1043
  %v1787 = vadd.f32 %v1783, %v1044
  %v1788 = vadd.f32 %v1784, %v1045
  %v1789 = vmul.f32 %v1785, 0.70710677
  %v1790 = vmul.f32 %v1786, 0.70710677
  %v1791 = vmul.f32 %v1787, 0.70710677
  %v1792 = vmul.f32 %v1788, 0.70710677
  %v1793 = vld [vmem:[%s5] sm:$0xff]
  %v1794 = vld [vmem:[%s5 + $0x8] sm:$0xff]
  %v1795 = vld [vmem:[%s5 + $0x10] sm:$0xff]
  %v1796 = vld [vmem:[%s5 + $0x18] sm:$0xff]
  %v1797 = vld [vmem:[%s5 + $0x20] sm:$0xff]
  %v1798 = vld [vmem:[%s5 + $0x28] sm:$0xff]
  %v1799 = vld [vmem:[%s5 + $0x30] sm:$0xff]
  %v1800 = vld [vmem:[%s5 + $0x38] sm:$0xff]
  %v1801 = vld [vmem:[%s5 + $0x40] sm:$0xff]
  %v1802 = vld [vmem:[%s5 + $0x48] sm:$0xff]
  %v1803 = vld [vmem:[%s5 + $0x50] sm:$0xff]
  %v1804 = vld [vmem:[%s5 + $0x58] sm:$0xff]
  %v1805 = vld [vmem:[%s5 + $0x60] sm:$0xff]
  %v1806 = vld [vmem:[%s5 + $0x68] sm:$0xff]
  %v1807 = vld [vmem:[%s5 + $0x70] sm:$0xff]
  %v1808 = vld [vmem:[%s5 + $0x78] sm:$0xff]
  %v1809 = vld [vmem:[%s6] sm:$0x1]
  %v1811 = vlaneseq
  %v1812 = vshrl.u32 %v1811, 7
  %v1813 = vsub.s32 0, %v1812
  %v1814 = vrot.slane %v1809, %v1813
  %1816 = vmatprep.subr.mxu0 0.0
  %1817 = vmatpush1.msra.mxu0 %v1793
  %1818 = vmatprep.subr.mxu0 0.0
  %1819 = vmatpush1.msra.mxu0 %v1794
  %1820 = vmatprep.subr.mxu0 0.0
  %1821 = vmatpush1.msra.mxu0 %v1795
  %1822 = vmatprep.subr.mxu0 0.0
  %1823 = vmatpush1.msra.mxu0 %v1796
  %1824 = vmatprep.subr.mxu0 0.0
  %1825 = vmatpush1.msra.mxu0 %v1797
  %1826 = vmatprep.subr.mxu0 0.0
  %1827 = vmatpush1.msra.mxu0 %v1798
  %1828 = vmatprep.subr.mxu0 0.0
  %1829 = vmatpush1.msra.mxu0 %v1799
  %1830 = vmatprep.subr.mxu0 0.0
  %1831 = vmatpush1.msra.mxu0 %v1800
  %1832 = vmatprep.subr.mxu0 0.0
  %1833 = vmatpush1.msra.mxu0 %v1801
  %1834 = vmatprep.subr.mxu0 0.0
  %1835 = vmatpush1.msra.mxu0 %v1802
  %1836 = vmatprep.subr.mxu0 0.0
  %1837 = vmatpush1.msra.mxu0 %v1803
  %1838 = vmatprep.subr.mxu0 0.0
  %1839 = vmatpush1.msra.mxu0 %v1804
  %1840 = vmatprep.subr.mxu0 0.0
  %1841 = vmatpush1.msra.mxu0 %v1805
  %1842 = vmatprep.subr.mxu0 0.0
  %1843 = vmatpush1.msra.mxu0 %v1806
  %1844 = vmatprep.subr.mxu0 0.0
  %1845 = vmatpush1.msra.mxu0 %v1807
  %1846 = vmatprep.subr.mxu0 0.0
  %1847 = vmatpush1.msra.mxu0 %v1808
  %1848 = vmatprep.subr.mxu0 0.0
  %1849 = vmatpush1.msra.mxu0 0.0
  %1850 = vmatprep.subr.mxu0 0.0
  %1851 = vmatpush1.msra.mxu0 0.0
  %1852 = vmatprep.subr.mxu0 0.0
  %1853 = vmatpush1.msra.mxu0 0.0
  %1854 = vmatprep.subr.mxu0 0.0
  %1855 = vmatpush1.msra.mxu0 0.0
  %1856 = vmatprep.subr.mxu0 0.0
  %1857 = vmatpush1.msra.mxu0 0.0
  %1858 = vmatprep.subr.mxu0 0.0
  %1859 = vmatpush1.msra.mxu0 0.0
  %1860 = vmatprep.subr.mxu0 0.0
  %1861 = vmatpush1.msra.mxu0 0.0
  %1862 = vmatprep.subr.mxu0 0.0
  %1863 = vmatpush1.msra.mxu0 0.0
  %1864 = vmatprep.subr.mxu0 0.0
  %1865 = vmatpush1.msra.mxu0 0.0
  %1866 = vmatprep.subr.mxu0 0.0
  %1867 = vmatpush1.msra.mxu0 0.0
  %1868 = vmatprep.subr.mxu0 0.0
  %1869 = vmatpush1.msra.mxu0 0.0
  %1870 = vmatprep.subr.mxu0 0.0
  %1871 = vmatpush1.msra.mxu0 0.0
  %1872 = vmatprep.subr.mxu0 0.0
  %1873 = vmatpush1.msra.mxu0 0.0
  %1874 = vmatprep.subr.mxu0 0.0
  %1875 = vmatpush1.msra.mxu0 0.0
  %1876 = vmatprep.subr.mxu0 0.0
  %1877 = vmatpush1.msra.mxu0 0.0
  %1878 = vmatprep.subr.mxu0 0.0
  %1879 = vmatpush1.msra.mxu0 0.0
  %1880 = vmatprep.mubr.f32.mxu0 0.0
  %1881 = vmatmul.mubr.f32.gmra.mrb[0].mxu0 %v1789
  %v1882 = vpop.f32.mrb[0].mxu0
  %v1883 = vadd.f32 %v1814, %v1882
  %v1884 = vpop.f32.mrb[0].mxu0
  %1885 = vmatprep.mubr.f32.mxu0 0.0
  %1886 = vmatmul.mubr.f32.gmra.mrb[0].mxu0 %v1790
  %v1887 = vpop.f32.mrb[0].mxu0
  %v1888 = vadd.f32 %v1814, %v1887
  %v1889 = vpop.f32.mrb[0].mxu0
  %1890 = vmatprep.mubr.f32.mxu0 0.0
  %1891 = vmatmul.mubr.f32.gmra.mrb[0].mxu0 %v1791
  %v1892 = vpop.f32.mrb[0].mxu0
  %v1893 = vadd.f32 %v1814, %v1892
  %v1894 = vpop.f32.mrb[0].mxu0
  %1895 = vmatprep.mubr.f32.mxu0 0.0
  %1896 = vmatmul.mubr.f32.gmra.mrb[0].mxu0 %v1792
  %v1897 = vpop.f32.mrb[0].mxu0
  %v1898 = vadd.f32 %v1814, %v1897
  %v1899 = vpop.f32.mrb[0].mxu0
  %1900 = vdwg.mxu0
  %v1901 = vadd.f32 %v1883, %v27
  %v1902 = vadd.f32 %v1888, %v28
  %v1903 = vadd.f32 %v1893, %v29
  %v1904 = vadd.f32 %v1898, %v30
  %v1905 = vmul.f32 %v1901, 0.70710677
  %v1906 = vmul.f32 %v1902, 0.70710677
  %v1907 = vmul.f32 %v1903, 0.70710677
  %v1908 = vmul.f32 %v1904, 0.70710677
  %1913 = vrot.lane.b32.xlu0 %v1905, 64
  %v1914 = vpop.permute.xlu0 %1913
  %1915 = vrot.lane.b32.xlu0 %v1906, 64
  %v1916 = vpop.permute.xlu0 %1915
  %1917 = vrot.lane.b32.xlu0 %v1907, 64
  %v1918 = vpop.permute.xlu0 %1917
  %1919 = vrot.lane.b32.xlu0 %v1908, 64
  %v1920 = vpop.permute.xlu0 %1919
  %v1925 = vsel %vm46, %v1883, %v1914
  %v1926 = vsel %vm46, %v1888, %v1916
  %v1927 = vsel %vm46, %v1893, %v1918
  %v1928 = vsel %vm46, %v1898, %v1920
  %1929 = vst [vmem:[%s7] sm:$0xff] %v1925
  %1930 = vst [vmem:[%s7 + $0x8] sm:$0xff] %v1926
  %1931 = vst [vmem:[%s7 + $0x10] sm:$0xff] %v1927
  %1932 = vst [vmem:[%s7 + $0x18] sm:$0xff] %v1928
  // Predicated region
  $region30: #{encoder_forward.1} parent=0 // pred_check
    _
  $region31: #{encoder_forward.1} parent=0 // pred_check_branch
    %1934 = sbr.rel (0) target = $region33
  $region32: #{encoder_forward.1} parent=0 // pred_region
    _
  $region33: #{encoder_forward.1} parent=0 // pred_fallthru
    _
  // Predicated region
  $region34: #{encoder_forward.1} parent=0 // pred_check
    _
  $region35: #{encoder_forward.1} parent=0 // pred_check_branch
    %1936 = sbr.rel (0) target = $region37
  $region36: #{encoder_forward.1} parent=0 // pred_region
    _
  $region37: #{encoder_forward.1} parent=0 // pred_fallthru
    _

</llo_original>
